<compile_context>
chip_gen: v5e
topology: v5e:2x2
jax: 0.10.0
libtpu: 0.0.40
codegen_flags: <defaults>
</compile_context>

<pallas_src>
import functools

import jax
import jax.numpy as jnp
from jax.experimental import pallas as pl
from jax.experimental.pallas import tpu as pltpu


# ----------------------------------------------------------------------------
# VMEM sizing helpers (capacity-derived so one code path fits every generation)
# ----------------------------------------------------------------------------
def _vmem_limits():
    cap = 64 * 1024 * 1024
    try:
        cap = int(getattr(pltpu.get_tpu_info(), "vmem_capacity_bytes", cap))
    except Exception:
        pass
    limit = min(cap // 2, 48 * 1024 * 1024)   # 48 MiB on v5e/v6e, 32 MiB on v7x
    block_budget = limit // 2                 # headroom for temps + double-buffer
    return limit, block_budget


def _pick_batch_tile(B, bytes_per_batch, budget_bytes, cap=16):
    """Largest divisor of B (<= cap) whose per-step working set fits the budget."""
    bt = 1
    for cand in range(1, min(B, cap) + 1):
        if B % cand == 0 and cand * bytes_per_batch <= budget_bytes:
            bt = cand
    return bt


# ----------------------------------------------------------------------------
# Kernel 1: attention-based filter generation (per-core partial filter sums).
# ----------------------------------------------------------------------------
def filter_gen_kernel(x_ref, wqkv_ref, wv1t_ref, out_ref, *, C, HW, Bt, inv_temp):
    i = pl.program_id(1)

    @pl.when(i == 0)
    def _init():
        out_ref[...] = jnp.zeros_like(out_ref)

    # ONE wide bf16 projection for the whole batch tile:
    #   (3C, C) @ (C, Bt*HW) -> (3C, Bt*HW), f32 accumulate on the MXU.
    qkv = jnp.dot(wqkv_ref[...], x_ref[...],
                  preferred_element_type=jnp.float32).astype(jnp.bfloat16)
    wv1t = wv1t_ref[...]                                       # (HW, kk) bf16

    fsum = jnp.zeros(out_ref.shape[1:], jnp.float32)           # (C, kk)
    # Per-image attention on 128-aligned lane slices of the shared projection.
    # Per-image temporaries are only (C, C) / (C, kk), so a static unroll keeps
    # live ranges small; the big qkv array is shared across iterations.
    for b in range(Bt):
        lo = b * HW
        q = qkv[0 * C:1 * C, lo:lo + HW]                       # (C, HW)
        kt = qkv[1 * C:2 * C, lo:lo + HW]                      # (C, HW)
        v0 = qkv[2 * C:3 * C, lo:lo + HW]                      # (C, HW)
        v = jnp.dot(v0, wv1t, preferred_element_type=jnp.float32)        # (C, kk)
        s = jax.lax.dot_general(q, kt, (((1,), (1,)), ((), ())),
                                preferred_element_type=jnp.float32)      # (C, C)
        s = s * inv_temp
        # softmax over dim=1 of the (B, C, C) score tensor == the row axis here
        m = jnp.max(s, axis=0, keepdims=True)
        e = jnp.exp(s - m)
        p = e * pl.reciprocal(jnp.sum(e, axis=0, keepdims=True), approx=True)
        fsum = fsum + jnp.dot(p.astype(jnp.bfloat16), v.astype(jnp.bfloat16),
                              preferred_element_type=jnp.float32)        # (C, kk)

    # Partial-sum accumulation: the output block stays resident in VMEM across
    # the inner ("arbitrary") axis and is written back to HBM once per split.
    out_ref[...] = out_ref[...] + fsum[None, :, :]


def generate_filter_partials(x_cb, wqkv, wv1t, *, C, HW, batch_tile, n_split,
                             temperature, vmem_limit):
    kk = wv1t.shape[1]
    n_tiles = x_cb.shape[1] // (batch_tile * HW)
    n_steps = n_tiles // n_split
    kern = functools.partial(filter_gen_kernel, C=C, HW=HW, Bt=batch_tile,
                             inv_temp=1.0 / temperature)
    return pl.pallas_call(
        kern,
        out_shape=jax.ShapeDtypeStruct((n_split, C, kk), jnp.float32),
        grid_spec=pltpu.PrefetchScalarGridSpec(
            num_scalar_prefetch=0,
            grid=(n_split, n_steps),
            in_specs=[
                pl.BlockSpec((C, batch_tile * HW),
                             lambda c, i: (0, c * n_steps + i)),
                pl.BlockSpec((3 * C, C), lambda c, i: (0, 0)),
                pl.BlockSpec((HW, kk), lambda c, i: (0, 0)),
            ],
            out_specs=pl.BlockSpec((1, C, kk), lambda c, i: (c, 0, 0)),
        ),
        compiler_params=pltpu.CompilerParams(
            dimension_semantics=("parallel", "arbitrary"),
            vmem_limit_bytes=vmem_limit),
    )(x_cb, wqkv, wv1t)


# ----------------------------------------------------------------------------
# Kernel 2: depthwise conv with dynamically generated per-channel filters.
# Compact lane-dense NCHW layout (Bt, C, H*W); each (dy, dx) tap is a static
# lane rotation of the flattened image masked by a precomputed padding mask.
# ----------------------------------------------------------------------------
def dwconv_kernel(x_ref, filt_ref, mask_ref, bias_ref, out_ref, *, W, HW, k):
    p = k // 2
    xf = x_ref[...]                                            # (Bt, C, HW) f32
    filt = filt_ref[...]                                       # (kk, C, 1)
    masks = mask_ref[...]                                      # (kk, HW)
    acc = jnp.broadcast_to(bias_ref[...], out_ref.shape)       # bias, hoisted
    for dy in range(k):
        for dx in range(k):
            tap = dy * k + dx
            src = (dy - p) * W + (dx - p)                      # flat source offset
            ftap = filt[tap]                                   # (C, 1) sublane col
            if src == 0:
                acc = acc + xf * ftap
            else:
                shifted = pltpu.roll(xf, shift=(-src) % HW, axis=2)
                acc = acc + shifted * masks[tap:tap + 1] * ftap
    out_ref[...] = acc


def depthwise_conv(x3, filt_t, masks, bias_col, *, W, k, batch_tile, vmem_limit):
    B, C, HW = x3.shape
    kk = k * k
    kern = functools.partial(dwconv_kernel, W=W, HW=HW, k=k)
    # TODO(synk): (perf-only) if profiling shows exposed DMA at step boundaries,
    # add pipeline_mode=pl.Buffered(3) on the x BlockSpec and sweep batch_tile.
    return pl.pallas_call(
        kern,
        out_shape=jax.ShapeDtypeStruct((B, C, HW), jnp.float32),
        grid_spec=pltpu.PrefetchScalarGridSpec(
            num_scalar_prefetch=0,
            grid=(B // batch_tile,),
            in_specs=[
                pl.BlockSpec((batch_tile, C, HW), lambda i: (i, 0, 0)),
                pl.BlockSpec((kk, C, 1), lambda i: (0, 0, 0)),
                pl.BlockSpec((kk, HW), lambda i: (0, 0)),
                pl.BlockSpec((C, 1), lambda i: (0, 0)),
            ],
            out_specs=pl.BlockSpec((batch_tile, C, HW), lambda i: (i, 0, 0)),
        ),
        compiler_params=pltpu.CompilerParams(
            dimension_semantics=("parallel",),
            vmem_limit_bytes=vmem_limit),
    )(x3, filt_t, masks, bias_col)


def _tap_masks(H, W, k):
    """Zero-padding validity mask for each (dy, dx) tap, flattened to (kk, H*W)."""
    p = k // 2
    ys = jnp.arange(H)[:, None]
    xs = jnp.arange(W)[None, :]
    rows = []
    for dy in range(k):
        for dx in range(k):
            oy, ox = dy - p, dx - p
            valid = ((ys + oy >= 0) & (ys + oy < H)
                     & (xs + ox >= 0) & (xs + ox < W))
            rows.append(valid.reshape(H * W).astype(jnp.float32))
    return jnp.stack(rows, axis=0)                              # (k*k, H*W)


# ----------------------------------------------------------------------------
# Full SelfConv2d forward (two Pallas kernels + tiny host glue).
# ----------------------------------------------------------------------------
def self_conv2d_forward(x, params, *, kernel_size, temperature, reduction):
    """x: (B, C, H, W) float32, NCHW (PyTorch convention)."""
    B, C, H, W = x.shape
    k = kernel_size
    kk = k * k
    HW = H * W
    Cr = max(C // reduction, 1)
    vmem_limit, block_budget = _vmem_limits()

    # ---- kernel 1: batched bf16 QKV projection + per-image attention ----
    x_cb = jnp.transpose(x.reshape(B, C, HW), (1, 0, 2)).reshape(C, B * HW)
    x_cb = x_cb.astype(jnp.bfloat16)
    wqkv = jnp.concatenate([params["wq"], params["wk"], params["wv0"]],
                           axis=0).astype(jnp.bfloat16)          # (3C, C)
    wv1t = params["wv1"].T.astype(jnp.bfloat16)                  # (HW, kk)

    bytes_per_img_1 = 24 * C * HW       # bf16 x (double-buffered) + qkv temps
    bt_filt = _pick_batch_tile(B, bytes_per_img_1, block_budget)
    if (bt_filt * HW) % 128 != 0:       # keep the lane block 128-aligned
        bt_filt = B
    n_tiles = B // bt_filt
    n_split = 2 if (n_tiles >= 2 and n_tiles % 2 == 0) else 1
    partials = generate_filter_partials(
        x_cb, wqkv, wv1t, C=C, HW=HW, batch_tile=bt_filt, n_split=n_split,
        temperature=temperature, vmem_limit=vmem_limit)          # (n_split, C, kk)

    # ---- tiny transform MLP (Cr x k*k tensors) in plain JAX, f32 ----
    fm = jnp.sum(partials, axis=0) * (1.0 / B)                   # (C, kk)
    h = params["wt1"] @ fm + params["bt1"][:, None]              # (Cr, kk)
    mu = jnp.mean(h)
    var = jnp.mean((h - mu) ** 2)
    hn = (h - mu) * jax.lax.rsqrt(var + 1e-5)
    hn = hn * params["ln_w"].reshape(Cr, kk) + params["ln_b"].reshape(Cr, kk)
    g = params["wt2"] @ jnp.maximum(hn, 0.0) + params["bt2"][:, None]   # (C, kk)

    # ---- kernel 2: depthwise conv, compact in/out (no pad/crop HBM passes) ----
    x3 = x.reshape(B, C, HW)
    filt_t = g.T.reshape(kk, C, 1)            # per-tap (C, 1) sublane columns
    masks = _tap_masks(H, W, k)               # (kk, HW) zero-padding masks
    bias_col = params["bias"].reshape(C, 1)
    bytes_per_img_2 = 28 * C * HW             # in/out double-buffered + temps
    bt_conv = _pick_batch_tile(B, bytes_per_img_2, block_budget)
    out = depthwise_conv(x3, filt_t, masks, bias_col, W=W, k=k,
                         batch_tile=bt_conv, vmem_limit=vmem_limit)  # (B, C, HW)
    return out.reshape(B, C, H, W)


# ----------------------------------------------------------------------------
# Pure-JAX reference for verification.
# ----------------------------------------------------------------------------
def reference_forward(x, params, *, kernel_size, temperature, reduction):
    B, C, H, W = x.shape
    k = kernel_size
    x2 = x.reshape(B, C, H * W)
    Q = jnp.einsum('oc,bcp->bop', params["wq"], x2)
    Kt = jnp.einsum('oc,bcp->bop', params["wk"], x2)
    V0 = jnp.einsum('oc,bcp->bop', params["wv0"], x2)
    V = jnp.einsum('bcp,kp->bck', V0, params["wv1"])
    S = jnp.einsum('bip,bjp->bij', Q, Kt)
    P = jax.nn.softmax(S / temperature, axis=1)
    F_ = jnp.einsum('bij,bjk->bik', P, V)
    fm = F_.mean(axis=0)
    f = fm.reshape(C, k, k)[None]
    h = jnp.einsum('oc,bchw->bohw', params["wt1"], f) + params["bt1"][None, :, None, None]
    mu = jnp.mean(h, axis=(1, 2, 3), keepdims=True)
    var = jnp.var(h, axis=(1, 2, 3), keepdims=True)
    hn = (h - mu) / jnp.sqrt(var + 1e-5) * params["ln_w"][None] + params["ln_b"][None]
    g = jnp.einsum('oc,bchw->bohw', params["wt2"], jax.nn.relu(hn)) \
        + params["bt2"][None, :, None, None]
    w_dw = g[0][:, None, :, :]                                   # (C, 1, k, k)
    out = jax.lax.conv_general_dilated(
        x, w_dw, window_strides=(1, 1),
        padding=[(k // 2, k // 2), (k // 2, k // 2)],
        dimension_numbers=('NCHW', 'OIHW', 'NCHW'),
        feature_group_count=C)
    return out + params["bias"][None, :, None, None]


# ----------------------------------------------------------------------------
def init_params(key, C, k, HW, reduction):
    Cr = max(C // reduction, 1)
    ks = jax.random.split(key, 8)
    s = 0.1
    return {
        "wq": s * jax.random.normal(ks[0], (C, C), jnp.float32),
        "wk": s * jax.random.normal(ks[1], (C, C), jnp.float32),
        "wv0": s * jax.random.normal(ks[2], (C, C), jnp.float32),
        "wv1": s * jax.random.normal(ks[3], (k * k, HW), jnp.float32),  # Linear(HW->k*k).weight
        "wt1": s * jax.random.normal(ks[4], (Cr, C), jnp.float32),
        "bt1": s * jax.random.normal(ks[5], (Cr,), jnp.float32),
        "ln_w": jnp.ones((Cr, k, k), jnp.float32),
        "ln_b": jnp.zeros((Cr, k, k), jnp.float32),
        "wt2": s * jax.random.normal(ks[6], (C, Cr), jnp.float32),
        "bt2": s * jax.random.normal(ks[7], (C,), jnp.float32),
        "bias": jnp.zeros((C,), jnp.float32),                           # nn.Parameter(zeros)
    }


if __name__ == "__main__":
    B, C = 2, 16
    H = W = 16                     # resolution = 16
    k = 3                          # kernel_size
    temperature = 2.0
    reduction = 8

    key = jax.random.PRNGKey(0)
    kx, kp = jax.random.split(key)
    x = jax.random.normal(kx, (B, C, H, W), jnp.float32)
    params = init_params(kp, C, k, H * W, reduction)

    fwd = jax.jit(functools.partial(self_conv2d_forward, kernel_size=k,
                                    temperature=temperature,
                                    reduction=reduction))
    out = jax.block_until_ready(fwd(x, params))

    ref = jax.block_until_ready(
        reference_forward(x, params, kernel_size=k,
                          temperature=temperature, reduction=reduction))

    assert out.shape == (B, C, H, W)
    err = float(jnp.max(jnp.abs(out - ref)))
    scale = float(jnp.max(jnp.abs(ref)))
    tol = 3e-2 * scale + 1e-2      # bf16 MXU operands -> looser tolerance
    assert err <= tol, f"max abs err {err} vs tol {tol} (ref scale {scale})"
    print("KERNEL_OK")
</pallas_src>

<mosaic_0001>
module attributes {stable_mosaic.version = 11 : i64} {
  func.func @filter_gen_kernel(%arg0: i32, %arg1: i32, %arg2: memref<16x512xbf16, #tpu.memory_space<vmem>>, %arg3: memref<48x16xbf16, #tpu.memory_space<vmem>>, %arg4: memref<256x9xbf16, #tpu.memory_space<vmem>>, %arg5: memref<1x16x9xf32, #tpu.memory_space<vmem>>) attributes {dimension_semantics = [#tpu.dimension_semantics<parallel>, #tpu.dimension_semantics<arbitrary>], iteration_bounds = array<i64: 1, 1>, scalar_prefetch = 0 : i64, scratch_operands = 0 : i64, tpu.core_type = #tpu.core_type<tc>, window_params = [{transform_indices = @transform_0, window_bounds = array<i64: 16, 512>}, {pipeline_mode = #tpu.pipeline_mode<synchronous>, transform_indices = @transform_1, window_bounds = array<i64: 48, 16>}, {pipeline_mode = #tpu.pipeline_mode<synchronous>, transform_indices = @transform_2, window_bounds = array<i64: 256, 9>}, {transform_indices = @transform_3, window_bounds = array<i64: 1, 16, 9>}]} {
    %c0_i32 = arith.constant 0 : i32
    %0 = arith.cmpi eq, %arg1, %c0_i32 : i32
    %1 = arith.extui %0 : i1 to i32
    %c0_i32_0 = arith.constant 0 : i32
    %2 = arith.cmpi ne, %1, %c0_i32_0 : i32
    scf.if %2 {
      %cst_25 = arith.constant 0.000000e+00 : f32
      %55 = vector.broadcast %cst_25 : f32 to vector<1x16x9xf32>
      %c0_26 = arith.constant 0 : index
      %c0_27 = arith.constant 0 : index
      %c0_28 = arith.constant 0 : index
      %56 = vector.load %arg5[%c0_26, %c0_27, %c0_28] : memref<1x16x9xf32, #tpu.memory_space<vmem>>, vector<1x16x9xf32>
      tpu.vector_store %arg5[%c0_26, %c0_27, %c0_28], %55 {strides = array<i32>} : memref<1x16x9xf32, #tpu.memory_space<vmem>>, vector<1x16x9xf32>,
    } else {
    }
    %c0 = arith.constant 0 : index
    %c0_1 = arith.constant 0 : index
    %3 = vector.load %arg3[%c0, %c0_1] : memref<48x16xbf16, #tpu.memory_space<vmem>>, vector<48x16xbf16>
    %c0_2 = arith.constant 0 : index
    %c0_3 = arith.constant 0 : index
    %4 = vector.load %arg2[%c0_2, %c0_3] : memref<16x512xbf16, #tpu.memory_space<vmem>>, vector<16x512xbf16>
    %cst = arith.constant dense<0.000000e+00> : vector<48x512xf32>
    %5 = tpu.matmul %3, %4, %cst {dimension_numbers = #tpu.dot_dimension_numbers<[1], [0], [0], [1], [0, 0, 1, 1], [], []>} : vector<48x16xbf16>, vector<16x512xbf16>, vector<48x512xf32> -> vector<48x512xf32>
    %6 = arith.truncf %5 : vector<48x512xf32> to vector<48x512xbf16>
    %c0_4 = arith.constant 0 : index
    %c0_5 = arith.constant 0 : index
    %7 = vector.load %arg4[%c0_4, %c0_5] : memref<256x9xbf16, #tpu.memory_space<vmem>>, vector<256x9xbf16>
    %cst_6 = arith.constant 0.000000e+00 : f32
    %8 = vector.broadcast %cst_6 : f32 to vector<16x9xf32>
    %9 = vector.extract_strided_slice %6 {offsets = [0, 0], sizes = [16, 256], strides = [1, 1]} : vector<48x512xbf16> to vector<16x256xbf16>
    %10 = vector.extract_strided_slice %6 {offsets = [16, 0], sizes = [16, 256], strides = [1, 1]} : vector<48x512xbf16> to vector<16x256xbf16>
    %11 = vector.extract_strided_slice %6 {offsets = [32, 0], sizes = [16, 256], strides = [1, 1]} : vector<48x512xbf16> to vector<16x256xbf16>
    %cst_7 = arith.constant dense<0.000000e+00> : vector<16x9xf32>
    %12 = tpu.matmul %11, %7, %cst_7 {dimension_numbers = #tpu.dot_dimension_numbers<[1], [0], [0], [1], [0, 0, 1, 1], [], []>} : vector<16x256xbf16>, vector<256x9xbf16>, vector<16x9xf32> -> vector<16x9xf32>
    %cst_8 = arith.constant dense<0.000000e+00> : vector<16x16xf32>
    %13 = tpu.matmul %9, %10, %cst_8 {dimension_numbers = #tpu.dot_dimension_numbers<[1], [1], [0], [0], [0, 0, 1, 0], [], []>} : vector<16x256xbf16>, vector<16x256xbf16>, vector<16x16xf32> -> vector<16x16xf32>
    %cst_9 = arith.constant 5.000000e-01 : f32
    %14 = vector.broadcast %cst_9 : f32 to vector<16x16xf32>
    %15 = arith.mulf %13, %14 : vector<16x16xf32>
    %cst_10 = arith.constant dense<0xFF800000> : vector<16xf32>
    %16 = vector.multi_reduction <maximumf>, %15, %cst_10 [0] : vector<16x16xf32> to vector<16xf32>
    %17 = vector.shape_cast %16 : vector<16xf32> to vector<1x16xf32>
    %18 = vector.broadcast %17 : vector<1x16xf32> to vector<16x16xf32>
    %19 = arith.subf %15, %18 : vector<16x16xf32>
    %20 = math.exp %19 : vector<16x16xf32>
    %cst_11 = arith.constant dense<0.000000e+00> : vector<16xf32>
    %21 = vector.multi_reduction <add>, %20, %cst_11 [0] : vector<16x16xf32> to vector<16xf32>
    %22 = vector.shape_cast %21 : vector<16xf32> to vector<1x16xf32>
    %23 = tpu.reciprocal %22 {approx = true} : vector<1x16xf32> -> vector<1x16xf32>
    %24 = vector.broadcast %23 : vector<1x16xf32> to vector<16x16xf32>
    %25 = arith.mulf %20, %24 : vector<16x16xf32>
    %26 = arith.truncf %25 : vector<16x16xf32> to vector<16x16xbf16>
    %27 = arith.truncf %12 : vector<16x9xf32> to vector<16x9xbf16>
    %cst_12 = arith.constant dense<0.000000e+00> : vector<16x9xf32>
    %28 = tpu.matmul %26, %27, %cst_12 {dimension_numbers = #tpu.dot_dimension_numbers<[1], [0], [0], [1], [0, 0, 1, 1], [], []>} : vector<16x16xbf16>, vector<16x9xbf16>, vector<16x9xf32> -> vector<16x9xf32>
    %29 = arith.addf %8, %28 : vector<16x9xf32>
    %30 = vector.extract_strided_slice %6 {offsets = [0, 256], sizes = [16, 256], strides = [1, 1]} : vector<48x512xbf16> to vector<16x256xbf16>
    %31 = vector.extract_strided_slice %6 {offsets = [16, 256], sizes = [16, 256], strides = [1, 1]} : vector<48x512xbf16> to vector<16x256xbf16>
    %32 = vector.extract_strided_slice %6 {offsets = [32, 256], sizes = [16, 256], strides = [1, 1]} : vector<48x512xbf16> to vector<16x256xbf16>
    %cst_13 = arith.constant dense<0.000000e+00> : vector<16x9xf32>
    %33 = tpu.matmul %32, %7, %cst_13 {dimension_numbers = #tpu.dot_dimension_numbers<[1], [0], [0], [1], [0, 0, 1, 1], [], []>} : vector<16x256xbf16>, vector<256x9xbf16>, vector<16x9xf32> -> vector<16x9xf32>
    %cst_14 = arith.constant dense<0.000000e+00> : vector<16x16xf32>
    %34 = tpu.matmul %30, %31, %cst_14 {dimension_numbers = #tpu.dot_dimension_numbers<[1], [1], [0], [0], [0, 0, 1, 0], [], []>} : vector<16x256xbf16>, vector<16x256xbf16>, vector<16x16xf32> -> vector<16x16xf32>
    %cst_15 = arith.constant 5.000000e-01 : f32
    %35 = vector.broadcast %cst_15 : f32 to vector<16x16xf32>
    %36 = arith.mulf %34, %35 : vector<16x16xf32>
    %cst_16 = arith.constant dense<0xFF800000> : vector<16xf32>
    %37 = vector.multi_reduction <maximumf>, %36, %cst_16 [0] : vector<16x16xf32> to vector<16xf32>
    %38 = vector.shape_cast %37 : vector<16xf32> to vector<1x16xf32>
    %39 = vector.broadcast %38 : vector<1x16xf32> to vector<16x16xf32>
    %40 = arith.subf %36, %39 : vector<16x16xf32>
    %41 = math.exp %40 : vector<16x16xf32>
    %cst_17 = arith.constant dense<0.000000e+00> : vector<16xf32>
    %42 = vector.multi_reduction <add>, %41, %cst_17 [0] : vector<16x16xf32> to vector<16xf32>
    %43 = vector.shape_cast %42 : vector<16xf32> to vector<1x16xf32>
    %44 = tpu.reciprocal %43 {approx = true} : vector<1x16xf32> -> vector<1x16xf32>
    %45 = vector.broadcast %44 : vector<1x16xf32> to vector<16x16xf32>
    %46 = arith.mulf %41, %45 : vector<16x16xf32>
    %47 = arith.truncf %46 : vector<16x16xf32> to vector<16x16xbf16>
    %48 = arith.truncf %33 : vector<16x9xf32> to vector<16x9xbf16>
    %cst_18 = arith.constant dense<0.000000e+00> : vector<16x9xf32>
    %49 = tpu.matmul %47, %48, %cst_18 {dimension_numbers = #tpu.dot_dimension_numbers<[1], [0], [0], [1], [0, 0, 1, 1], [], []>} : vector<16x16xbf16>, vector<16x9xbf16>, vector<16x9xf32> -> vector<16x9xf32>
    %50 = arith.addf %29, %49 : vector<16x9xf32>
    %c0_19 = arith.constant 0 : index
    %c0_20 = arith.constant 0 : index
    %c0_21 = arith.constant 0 : index
    %51 = vector.load %arg5[%c0_19, %c0_20, %c0_21] : memref<1x16x9xf32, #tpu.memory_space<vmem>>, vector<1x16x9xf32>
    %52 = vector.shape_cast %50 : vector<16x9xf32> to vector<1x16x9xf32>
    %53 = arith.addf %51, %52 : vector<1x16x9xf32>
    %c0_22 = arith.constant 0 : index
    %c0_23 = arith.constant 0 : index
    %c0_24 = arith.constant 0 : index
    %54 = vector.load %arg5[%c0_22, %c0_23, %c0_24] : memref<1x16x9xf32, #tpu.memory_space<vmem>>, vector<1x16x9xf32>
    tpu.vector_store %arg5[%c0_22, %c0_23, %c0_24], %53 {strides = array<i32>} : memref<1x16x9xf32, #tpu.memory_space<vmem>>, vector<1x16x9xf32>,
    return
  }
  func.func @transform_0(%arg0: i32, %arg1: i32) -> (i32, i32) {
    %c1_i32 = arith.constant 1 : i32
    %0 = arith.muli %arg0, %c1_i32 : i32
    %1 = arith.addi %0, %arg1 : i32
    %c0_i32 = arith.constant 0 : i32
    %c0_i32_0 = arith.constant 0 : i32
    return %c0_i32, %1 : i32, i32
  }
  func.func @transform_1(%arg0: i32, %arg1: i32) -> (i32, i32) {
    %c0_i32 = arith.constant 0 : i32
    %c0_i32_0 = arith.constant 0 : i32
    %c0_i32_1 = arith.constant 0 : i32
    return %c0_i32, %c0_i32_0 : i32, i32
  }
  func.func @transform_2(%arg0: i32, %arg1: i32) -> (i32, i32) {
    %c0_i32 = arith.constant 0 : i32
    %c0_i32_0 = arith.constant 0 : i32
    %c0_i32_1 = arith.constant 0 : i32
    return %c0_i32, %c0_i32_0 : i32, i32
  }
  func.func @transform_3(%arg0: i32, %arg1: i32) -> (i32, i32, i32) {
    %c0_i32 = arith.constant 0 : i32
    %c0_i32_0 = arith.constant 0 : i32
    %c0_i32_1 = arith.constant 0 : i32
    return %arg0, %c0_i32, %c0_i32_0 : i32, i32, i32
  }
}

module attributes {stable_mosaic.version = 11 : i64} {
  func.func @dwconv_kernel(%arg0: i32, %arg1: memref<2x16x256xf32, #tpu.memory_space<vmem>>, %arg2: memref<9x16x1xf32, #tpu.memory_space<vmem>>, %arg3: memref<9x256xf32, #tpu.memory_space<vmem>>, %arg4: memref<16x1xf32, #tpu.memory_space<vmem>>, %arg5: memref<2x16x256xf32, #tpu.memory_space<vmem>>) attributes {dimension_semantics = [#tpu.dimension_semantics<parallel>], iteration_bounds = array<i64: 1>, scalar_prefetch = 0 : i64, scratch_operands = 0 : i64, tpu.core_type = #tpu.core_type<tc>, window_params = [{transform_indices = @transform_0, window_bounds = array<i64: 2, 16, 256>}, {pipeline_mode = #tpu.pipeline_mode<synchronous>, transform_indices = @transform_1, window_bounds = array<i64: 9, 16, 1>}, {pipeline_mode = #tpu.pipeline_mode<synchronous>, transform_indices = @transform_2, window_bounds = array<i64: 9, 256>}, {pipeline_mode = #tpu.pipeline_mode<synchronous>, transform_indices = @transform_3, window_bounds = array<i64: 16, 1>}, {transform_indices = @transform_4, window_bounds = array<i64: 2, 16, 256>}]} {
    %c0 = arith.constant 0 : index
    %c0_0 = arith.constant 0 : index
    %c0_1 = arith.constant 0 : index
    %0 = vector.load %arg1[%c0, %c0_0, %c0_1] : memref<2x16x256xf32, #tpu.memory_space<vmem>>, vector<2x16x256xf32>
    %c0_2 = arith.constant 0 : index
    %c0_3 = arith.constant 0 : index
    %c0_4 = arith.constant 0 : index
    %1 = vector.load %arg2[%c0_2, %c0_3, %c0_4] : memref<9x16x1xf32, #tpu.memory_space<vmem>>, vector<9x16x1xf32>
    %c0_5 = arith.constant 0 : index
    %c0_6 = arith.constant 0 : index
    %2 = vector.load %arg3[%c0_5, %c0_6] : memref<9x256xf32, #tpu.memory_space<vmem>>, vector<9x256xf32>
    %c0_7 = arith.constant 0 : index
    %c0_8 = arith.constant 0 : index
    %3 = vector.load %arg4[%c0_7, %c0_8] : memref<16x1xf32, #tpu.memory_space<vmem>>, vector<16x1xf32>
    %4 = vector.shape_cast %3 : vector<16x1xf32> to vector<1x16x1xf32>
    %5 = vector.broadcast %4 : vector<1x16x1xf32> to vector<2x16x256xf32>
    %6 = vector.extract_strided_slice %1 {offsets = [0, 0, 0], sizes = [1, 16, 1], strides = [1, 1, 1]} : vector<9x16x1xf32> to vector<1x16x1xf32>
    %7 = vector.shape_cast %6 : vector<1x16x1xf32> to vector<16x1xf32>
    %c17_i32 = arith.constant 17 : i32
    %8 = tpu.dynamic_rotate %0 by %c17_i32 dim 2 : vector<2x16x256xf32>, i32 -> vector<2x16x256xf32>
    %9 = vector.extract_strided_slice %2 {offsets = [0, 0], sizes = [1, 256], strides = [1, 1]} : vector<9x256xf32> to vector<1x256xf32>
    %10 = vector.shape_cast %9 : vector<1x256xf32> to vector<1x1x256xf32>
    %11 = vector.broadcast %10 : vector<1x1x256xf32> to vector<2x16x256xf32>
    %12 = arith.mulf %8, %11 : vector<2x16x256xf32>
    %13 = vector.shape_cast %7 : vector<16x1xf32> to vector<1x16x1xf32>
    %14 = vector.broadcast %13 : vector<1x16x1xf32> to vector<2x16x256xf32>
    %15 = arith.mulf %12, %14 : vector<2x16x256xf32>
    %16 = arith.addf %5, %15 : vector<2x16x256xf32>
    %17 = vector.extract_strided_slice %1 {offsets = [1, 0, 0], sizes = [1, 16, 1], strides = [1, 1, 1]} : vector<9x16x1xf32> to vector<1x16x1xf32>
    %18 = vector.shape_cast %17 : vector<1x16x1xf32> to vector<16x1xf32>
    %c16_i32 = arith.constant 16 : i32
    %19 = tpu.dynamic_rotate %0 by %c16_i32 dim 2 : vector<2x16x256xf32>, i32 -> vector<2x16x256xf32>
    %20 = vector.extract_strided_slice %2 {offsets = [1, 0], sizes = [1, 256], strides = [1, 1]} : vector<9x256xf32> to vector<1x256xf32>
    %21 = vector.shape_cast %20 : vector<1x256xf32> to vector<1x1x256xf32>
    %22 = vector.broadcast %21 : vector<1x1x256xf32> to vector<2x16x256xf32>
    %23 = arith.mulf %19, %22 : vector<2x16x256xf32>
    %24 = vector.shape_cast %18 : vector<16x1xf32> to vector<1x16x1xf32>
    %25 = vector.broadcast %24 : vector<1x16x1xf32> to vector<2x16x256xf32>
    %26 = arith.mulf %23, %25 : vector<2x16x256xf32>
    %27 = arith.addf %16, %26 : vector<2x16x256xf32>
    %28 = vector.extract_strided_slice %1 {offsets = [2, 0, 0], sizes = [1, 16, 1], strides = [1, 1, 1]} : vector<9x16x1xf32> to vector<1x16x1xf32>
    %29 = vector.shape_cast %28 : vector<1x16x1xf32> to vector<16x1xf32>
    %c15_i32 = arith.constant 15 : i32
    %30 = tpu.dynamic_rotate %0 by %c15_i32 dim 2 : vector<2x16x256xf32>, i32 -> vector<2x16x256xf32>
    %31 = vector.extract_strided_slice %2 {offsets = [2, 0], sizes = [1, 256], strides = [1, 1]} : vector<9x256xf32> to vector<1x256xf32>
    %32 = vector.shape_cast %31 : vector<1x256xf32> to vector<1x1x256xf32>
    %33 = vector.broadcast %32 : vector<1x1x256xf32> to vector<2x16x256xf32>
    %34 = arith.mulf %30, %33 : vector<2x16x256xf32>
    %35 = vector.shape_cast %29 : vector<16x1xf32> to vector<1x16x1xf32>
    %36 = vector.broadcast %35 : vector<1x16x1xf32> to vector<2x16x256xf32>
    %37 = arith.mulf %34, %36 : vector<2x16x256xf32>
    %38 = arith.addf %27, %37 : vector<2x16x256xf32>
    %39 = vector.extract_strided_slice %1 {offsets = [3, 0, 0], sizes = [1, 16, 1], strides = [1, 1, 1]} : vector<9x16x1xf32> to vector<1x16x1xf32>
    %40 = vector.shape_cast %39 : vector<1x16x1xf32> to vector<16x1xf32>
    %c1_i32 = arith.constant 1 : i32
    %41 = tpu.dynamic_rotate %0 by %c1_i32 dim 2 : vector<2x16x256xf32>, i32 -> vector<2x16x256xf32>
    %42 = vector.extract_strided_slice %2 {offsets = [3, 0], sizes = [1, 256], strides = [1, 1]} : vector<9x256xf32> to vector<1x256xf32>
    %43 = vector.shape_cast %42 : vector<1x256xf32> to vector<1x1x256xf32>
    %44 = vector.broadcast %43 : vector<1x1x256xf32> to vector<2x16x256xf32>
    %45 = arith.mulf %41, %44 : vector<2x16x256xf32>
    %46 = vector.shape_cast %40 : vector<16x1xf32> to vector<1x16x1xf32>
    %47 = vector.broadcast %46 : vector<1x16x1xf32> to vector<2x16x256xf32>
    %48 = arith.mulf %45, %47 : vector<2x16x256xf32>
    %49 = arith.addf %38, %48 : vector<2x16x256xf32>
    %50 = vector.extract_strided_slice %1 {offsets = [4, 0, 0], sizes = [1, 16, 1], strides = [1, 1, 1]} : vector<9x16x1xf32> to vector<1x16x1xf32>
    %51 = vector.shape_cast %50 : vector<1x16x1xf32> to vector<16x1xf32>
    %52 = vector.shape_cast %51 : vector<16x1xf32> to vector<1x16x1xf32>
    %53 = vector.broadcast %52 : vector<1x16x1xf32> to vector<2x16x256xf32>
    %54 = arith.mulf %0, %53 : vector<2x16x256xf32>
    %55 = arith.addf %49, %54 : vector<2x16x256xf32>
    %56 = vector.extract_strided_slice %1 {offsets = [5, 0, 0], sizes = [1, 16, 1], strides = [1, 1, 1]} : vector<9x16x1xf32> to vector<1x16x1xf32>
    %57 = vector.shape_cast %56 : vector<1x16x1xf32> to vector<16x1xf32>
    %c255_i32 = arith.constant 255 : i32
    %58 = tpu.dynamic_rotate %0 by %c255_i32 dim 2 : vector<2x16x256xf32>, i32 -> vector<2x16x256xf32>
    %59 = vector.extract_strided_slice %2 {offsets = [5, 0], sizes = [1, 256], strides = [1, 1]} : vector<9x256xf32> to vector<1x256xf32>
    %60 = vector.shape_cast %59 : vector<1x256xf32> to vector<1x1x256xf32>
    %61 = vector.broadcast %60 : vector<1x1x256xf32> to vector<2x16x256xf32>
    %62 = arith.mulf %58, %61 : vector<2x16x256xf32>
    %63 = vector.shape_cast %57 : vector<16x1xf32> to vector<1x16x1xf32>
    %64 = vector.broadcast %63 : vector<1x16x1xf32> to vector<2x16x256xf32>
    %65 = arith.mulf %62, %64 : vector<2x16x256xf32>
    %66 = arith.addf %55, %65 : vector<2x16x256xf32>
    %67 = vector.extract_strided_slice %1 {offsets = [6, 0, 0], sizes = [1, 16, 1], strides = [1, 1, 1]} : vector<9x16x1xf32> to vector<1x16x1xf32>
    %68 = vector.shape_cast %67 : vector<1x16x1xf32> to vector<16x1xf32>
    %c241_i32 = arith.constant 241 : i32
    %69 = tpu.dynamic_rotate %0 by %c241_i32 dim 2 : vector<2x16x256xf32>, i32 -> vector<2x16x256xf32>
    %70 = vector.extract_strided_slice %2 {offsets = [6, 0], sizes = [1, 256], strides = [1, 1]} : vector<9x256xf32> to vector<1x256xf32>
    %71 = vector.shape_cast %70 : vector<1x256xf32> to vector<1x1x256xf32>
    %72 = vector.broadcast %71 : vector<1x1x256xf32> to vector<2x16x256xf32>
    %73 = arith.mulf %69, %72 : vector<2x16x256xf32>
    %74 = vector.shape_cast %68 : vector<16x1xf32> to vector<1x16x1xf32>
    %75 = vector.broadcast %74 : vector<1x16x1xf32> to vector<2x16x256xf32>
    %76 = arith.mulf %73, %75 : vector<2x16x256xf32>
    %77 = arith.addf %66, %76 : vector<2x16x256xf32>
    %78 = vector.extract_strided_slice %1 {offsets = [7, 0, 0], sizes = [1, 16, 1], strides = [1, 1, 1]} : vector<9x16x1xf32> to vector<1x16x1xf32>
    %79 = vector.shape_cast %78 : vector<1x16x1xf32> to vector<16x1xf32>
    %c240_i32 = arith.constant 240 : i32
    %80 = tpu.dynamic_rotate %0 by %c240_i32 dim 2 : vector<2x16x256xf32>, i32 -> vector<2x16x256xf32>
    %81 = vector.extract_strided_slice %2 {offsets = [7, 0], sizes = [1, 256], strides = [1, 1]} : vector<9x256xf32> to vector<1x256xf32>
    %82 = vector.shape_cast %81 : vector<1x256xf32> to vector<1x1x256xf32>
    %83 = vector.broadcast %82 : vector<1x1x256xf32> to vector<2x16x256xf32>
    %84 = arith.mulf %80, %83 : vector<2x16x256xf32>
    %85 = vector.shape_cast %79 : vector<16x1xf32> to vector<1x16x1xf32>
    %86 = vector.broadcast %85 : vector<1x16x1xf32> to vector<2x16x256xf32>
    %87 = arith.mulf %84, %86 : vector<2x16x256xf32>
    %88 = arith.addf %77, %87 : vector<2x16x256xf32>
    %89 = vector.extract_strided_slice %1 {offsets = [8, 0, 0], sizes = [1, 16, 1], strides = [1, 1, 1]} : vector<9x16x1xf32> to vector<1x16x1xf32>
    %90 = vector.shape_cast %89 : vector<1x16x1xf32> to vector<16x1xf32>
    %c239_i32 = arith.constant 239 : i32
    %91 = tpu.dynamic_rotate %0 by %c239_i32 dim 2 : vector<2x16x256xf32>, i32 -> vector<2x16x256xf32>
    %92 = vector.extract_strided_slice %2 {offsets = [8, 0], sizes = [1, 256], strides = [1, 1]} : vector<9x256xf32> to vector<1x256xf32>
    %93 = vector.shape_cast %92 : vector<1x256xf32> to vector<1x1x256xf32>
    %94 = vector.broadcast %93 : vector<1x1x256xf32> to vector<2x16x256xf32>
    %95 = arith.mulf %91, %94 : vector<2x16x256xf32>
    %96 = vector.shape_cast %90 : vector<16x1xf32> to vector<1x16x1xf32>
    %97 = vector.broadcast %96 : vector<1x16x1xf32> to vector<2x16x256xf32>
    %98 = arith.mulf %95, %97 : vector<2x16x256xf32>
    %99 = arith.addf %88, %98 : vector<2x16x256xf32>
    %c0_9 = arith.constant 0 : index
    %c0_10 = arith.constant 0 : index
    %c0_11 = arith.constant 0 : index
    %100 = vector.load %arg5[%c0_9, %c0_10, %c0_11] : memref<2x16x256xf32, #tpu.memory_space<vmem>>, vector<2x16x256xf32>
    tpu.vector_store %arg5[%c0_9, %c0_10, %c0_11], %99 {strides = array<i32>} : memref<2x16x256xf32, #tpu.memory_space<vmem>>, vector<2x16x256xf32>,
    return
  }
  func.func @transform_0(%arg0: i32) -> (i32, i32, i32) {
    %c0_i32 = arith.constant 0 : i32
    %c0_i32_0 = arith.constant 0 : i32
    %c0_i32_1 = arith.constant 0 : i32
    return %arg0, %c0_i32, %c0_i32_0 : i32, i32, i32
  }
  func.func @transform_1(%arg0: i32) -> (i32, i32, i32) {
    %c0_i32 = arith.constant 0 : i32
    %c0_i32_0 = arith.constant 0 : i32
    %c0_i32_1 = arith.constant 0 : i32
    %c0_i32_2 = arith.constant 0 : i32
    return %c0_i32, %c0_i32_0, %c0_i32_1 : i32, i32, i32
  }
  func.func @transform_2(%arg0: i32) -> (i32, i32) {
    %c0_i32 = arith.constant 0 : i32
    %c0_i32_0 = arith.constant 0 : i32
    %c0_i32_1 = arith.constant 0 : i32
    return %c0_i32, %c0_i32_0 : i32, i32
  }
  func.func @transform_3(%arg0: i32) -> (i32, i32) {
    %c0_i32 = arith.constant 0 : i32
    %c0_i32_0 = arith.constant 0 : i32
    %c0_i32_1 = arith.constant 0 : i32
    return %c0_i32, %c0_i32_0 : i32, i32
  }
  func.func @transform_4(%arg0: i32) -> (i32, i32, i32) {
    %c0_i32 = arith.constant 0 : i32
    %c0_i32_0 = arith.constant 0 : i32
    %c0_i32_1 = arith.constant 0 : i32
    return %arg0, %c0_i32, %c0_i32_0 : i32, i32, i32
  }
}

</mosaic_0001>

<llo_original>
// kernel: self_conv2d_forward.3
$region0: #{self_conv2d_forward.3}
  #allocation0 [shape = 'u32[]', space=smem, size = 0x4, offset = 0x4, fixed_abs, tag = 'smem constant byte address 0x4 - core index']
  #allocation1 [shape = 'u32[72,128]{1,0:T(1,128)}', space=vmem, size = 0x9000, scoped, tag = 'internal scratch']
  %s0 = inlined_call_operand.vmem [shape: f32[2,16,256], index: 0, kind: input, shape index: {}]
  %s1 = inlined_call_operand.vmem [shape: f32[9,16,1], index: 1, kind: input, shape index: {}]
  %s2 = inlined_call_operand.vmem [shape: f32[9,256], index: 2, kind: input, shape index: {}]
  %s3 = inlined_call_operand.vmem [shape: f32[16,1], index: 3, kind: input, shape index: {}]
  %s4 = inlined_call_operand.vmem [shape: f32[2,16,256], index: 4, kind: output, shape index: {}]
  %s5 = sld [smem:[#allocation0]]
  $region26: #{self_conv2d_forward.3} parent=0
    _
  %s7 = ssub.s32 1, %s5
  %s8 = scalar_select 0, %s7, %s5
  // Predicated region
  $region2: #{self_conv2d_forward.3} parent=0 // pred_check
    _
  $region3: #{self_conv2d_forward.3} parent=0 // pred_check_branch
    %10 = sbr.rel (0) target = $region5
  $region4: #{self_conv2d_forward.3} parent=0 // pred_region
    _
  $region5: #{self_conv2d_forward.3} parent=0 // pred_fallthru
    _
  // Predicated region
  $region6: #{self_conv2d_forward.3} parent=0 // pred_check
    _
  $region7: #{self_conv2d_forward.3} parent=0 // pred_check_branch
    %12 = sbr.rel (0) target = $region9
  $region8: #{self_conv2d_forward.3} parent=0 // pred_region
    _
  $region9: #{self_conv2d_forward.3} parent=0 // pred_fallthru
    _
  // Predicated region
  $region10: #{self_conv2d_forward.3} parent=0 // pred_check
    _
  $region11: #{self_conv2d_forward.3} parent=0 // pred_check_branch
    %14 = sbr.rel (0) target = $region13
  $region12: #{self_conv2d_forward.3} parent=0 // pred_region
    _
  $region13: #{self_conv2d_forward.3} parent=0 // pred_fallthru
    _
  // Predicated region
  $region14: #{self_conv2d_forward.3} parent=0 // pred_check
    _
  $region15: #{self_conv2d_forward.3} parent=0 // pred_check_branch
    %16 = sbr.rel (0) target = $region17
  $region16: #{self_conv2d_forward.3} parent=0 // pred_region
    _
  $region17: #{self_conv2d_forward.3} parent=0 // pred_fallthru
    _
  %v17 = vld [vmem:[%s0] sm:$0xff]
  %v18 = vld [vmem:[%s0 + $0x8] sm:$0xff]
  %v19 = vld [vmem:[%s0 + $0x10] sm:$0xff]
  %v20 = vld [vmem:[%s0 + $0x18] sm:$0xff]
  %v21 = vld [vmem:[%s0 + $0x20] sm:$0xff]
  %v22 = vld [vmem:[%s0 + $0x28] sm:$0xff]
  %v23 = vld [vmem:[%s0 + $0x30] sm:$0xff]
  %v24 = vld [vmem:[%s0 + $0x38] sm:$0xff]
  %v25 = vld [vmem:[%s1] sm:$0xff]
  %v26 = vld [vmem:[%s1 + $0x8] sm:$0xff]
  %v27 = vld [vmem:[%s1 + $0x10] sm:$0xff]
  %v28 = vld [vmem:[%s1 + $0x18] sm:$0xff]
  %v29 = vld [vmem:[%s1 + $0x20] sm:$0xff]
  %v30 = vld [vmem:[%s1 + $0x28] sm:$0xff]
  %v31 = vld [vmem:[%s1 + $0x30] sm:$0xff]
  %v32 = vld [vmem:[%s1 + $0x38] sm:$0xff]
  %v33 = vld [vmem:[%s1 + $0x40] sm:$0xff]
  %v34 = vld [vmem:[%s1 + $0x48] sm:$0xff]
  %v35 = vld [vmem:[%s1 + $0x50] sm:$0xff]
  %v36 = vld [vmem:[%s1 + $0x58] sm:$0xff]
  %v37 = vld [vmem:[%s1 + $0x60] sm:$0xff]
  %v38 = vld [vmem:[%s1 + $0x68] sm:$0xff]
  %v39 = vld [vmem:[%s1 + $0x70] sm:$0xff]
  %v40 = vld [vmem:[%s1 + $0x78] sm:$0xff]
  %v41 = vld [vmem:[%s1 + $0x80] sm:$0xff]
  %v42 = vld [vmem:[%s1 + $0x88] sm:$0xff]
  %v43 = vld [vmem:[%s2] sm:$0xff]
  %v44 = vld [vmem:[%s2 + $0x8] sm:$0xff]
  %v45 = vld [vmem:[%s2 + $0x10] sm:$0x1]
  %v46 = vld [vmem:[%s2 + $0x18] sm:$0x1]
  %v47 = vld [vmem:[%s3] sm:$0xff]
  %v48 = vld [vmem:[%s3 + $0x8] sm:$0xff]
  %50 = vset.pattern.permute.xlu0 0
  %51 = vperm.xlu0 %50, %v47
  %v52 = vpop.permute.xlu0 %51
  %55 = vset.pattern.permute.xlu0 0
  %56 = vperm.xlu0 %55, %v48
  %v57 = vpop.permute.xlu0 %56
  %59 = vrot.lane.b32.xlu0 %v17, 17
  %v60 = vpop.permute.xlu0 %59
  %61 = vrot.lane.b32.xlu0 %v19, 17
  %v62 = vpop.permute.xlu0 %61
  %63 = vrot.lane.b32.xlu0 %v21, 17
  %v64 = vpop.permute.xlu0 %63
  %65 = vrot.lane.b32.xlu0 %v23, 17
  %v66 = vpop.permute.xlu0 %65
  %67 = vrot.lane.b32.xlu0 %v18, 17
  %v68 = vpop.permute.xlu0 %67
  %69 = vrot.lane.b32.xlu0 %v20, 17
  %v70 = vpop.permute.xlu0 %69
  %71 = vrot.lane.b32.xlu0 %v22, 17
  %v72 = vpop.permute.xlu0 %71
  %73 = vrot.lane.b32.xlu0 %v24, 17
  %v74 = vpop.permute.xlu0 %73
  %v75 = vlaneseq
  %v76 = vand.u32 %v75, 127
  %vm77 = vcmp.lt.s32.totalorder %v76, 17
  %v78 = vsel %vm77, %v60, %v68
  %v79 = vsel %vm77, %v62, %v70
  %v80 = vsel %vm77, %v64, %v72
  %v81 = vsel %vm77, %v66, %v74
  %v82 = vsel %vm77, %v68, %v60
  %v83 = vsel %vm77, %v70, %v62
  %v84 = vsel %vm77, %v72, %v64
  %v85 = vsel %vm77, %v74, %v66
  %v86 = vperm.slane %v43, 0
  %v87 = vperm.slane %v44, 0
  %v88 = vmul.f32 %v82, %v86
  %v89 = vmul.f32 %v78, %v87
  %v90 = vmul.f32 %v83, %v86
  %v91 = vmul.f32 %v79, %v87
  %v92 = vmul.f32 %v84, %v86
  %v93 = vmul.f32 %v80, %v87
  %v94 = vmul.f32 %v85, %v86
  %v95 = vmul.f32 %v81, %v87
  %97 = vset.pattern.permute.xlu0 0
  %98 = vperm.xlu0 %97, %v25
  %v99 = vpop.permute.xlu0 %98
  %102 = vset.pattern.permute.xlu0 0
  %103 = vperm.xlu0 %102, %v26
  %v104 = vpop.permute.xlu0 %103
  %v106 = vmul.f32 %v88, %v99
  %v107 = vmul.f32 %v89, %v99
  %v108 = vmul.f32 %v90, %v104
  %v109 = vmul.f32 %v91, %v104
  %v110 = vmul.f32 %v92, %v99
  %v111 = vmul.f32 %v93, %v99
  %v112 = vmul.f32 %v94, %v104
  %v113 = vmul.f32 %v95, %v104
  %v114 = vadd.f32 %v52, %v106
  %v115 = vadd.f32 %v52, %v107
  %v116 = vadd.f32 %v57, %v108
  %v117 = vadd.f32 %v57, %v109
  %v118 = vadd.f32 %v52, %v110
  %v119 = vadd.f32 %v52, %v111
  %v120 = vadd.f32 %v57, %v112
  %v121 = vadd.f32 %v57, %v113
  %122 = vrot.lane.b32.xlu0 %v17, 16
  %v123 = vpop.permute.xlu0 %122
  %124 = vrot.lane.b32.xlu0 %v19, 16
  %v125 = vpop.permute.xlu0 %124
  %126 = vrot.lane.b32.xlu0 %v21, 16
  %v127 = vpop.permute.xlu0 %126
  %128 = vrot.lane.b32.xlu0 %v23, 16
  %v129 = vpop.permute.xlu0 %128
  %130 = vrot.lane.b32.xlu0 %v18, 16
  %v131 = vpop.permute.xlu0 %130
  %132 = vrot.lane.b32.xlu0 %v20, 16
  %v133 = vpop.permute.xlu0 %132
  %134 = vrot.lane.b32.xlu0 %v22, 16
  %v135 = vpop.permute.xlu0 %134
  %136 = vrot.lane.b32.xlu0 %v24, 16
  %v137 = vpop.permute.xlu0 %136
  %vm138 = vcmp.lt.s32.totalorder %v76, 16
  %v139 = vsel %vm138, %v123, %v131
  %v140 = vsel %vm138, %v125, %v133
  %v141 = vsel %vm138, %v127, %v135
  %v142 = vsel %vm138, %v129, %v137
  %v143 = vsel %vm138, %v131, %v123
  %v144 = vsel %vm138, %v133, %v125
  %v145 = vsel %vm138, %v135, %v127
  %v146 = vsel %vm138, %v137, %v129
  %v147 = vperm.slane %v43, 1
  %v148 = vperm.slane %v44, 1
  %v149 = vmul.f32 %v143, %v147
  %v150 = vmul.f32 %v139, %v148
  %v151 = vmul.f32 %v144, %v147
  %v152 = vmul.f32 %v140, %v148
  %v153 = vmul.f32 %v145, %v147
  %v154 = vmul.f32 %v141, %v148
  %v155 = vmul.f32 %v146, %v147
  %v156 = vmul.f32 %v142, %v148
  %158 = vset.pattern.permute.xlu0 0
  %159 = vperm.xlu0 %158, %v27
  %v160 = vpop.permute.xlu0 %159
  %163 = vset.pattern.permute.xlu0 0
  %164 = vperm.xlu0 %163, %v28
  %v165 = vpop.permute.xlu0 %164
  %v167 = vmul.f32 %v149, %v160
  %v168 = vmul.f32 %v150, %v160
  %v169 = vmul.f32 %v151, %v165
  %v170 = vmul.f32 %v152, %v165
  %v171 = vmul.f32 %v153, %v160
  %v172 = vmul.f32 %v154, %v160
  %v173 = vmul.f32 %v155, %v165
  %v174 = vmul.f32 %v156, %v165
  %v175 = vadd.f32 %v114, %v167
  %v176 = vadd.f32 %v115, %v168
  %v177 = vadd.f32 %v116, %v169
  %v178 = vadd.f32 %v117, %v170
  %v179 = vadd.f32 %v118, %v171
  %v180 = vadd.f32 %v119, %v172
  %v181 = vadd.f32 %v120, %v173
  %v182 = vadd.f32 %v121, %v174
  %183 = vrot.lane.b32.xlu0 %v17, 15
  %v184 = vpop.permute.xlu0 %183
  %185 = vrot.lane.b32.xlu0 %v19, 15
  %v186 = vpop.permute.xlu0 %185
  %187 = vrot.lane.b32.xlu0 %v21, 15
  %v188 = vpop.permute.xlu0 %187
  %189 = vrot.lane.b32.xlu0 %v23, 15
  %v190 = vpop.permute.xlu0 %189
  %191 = vrot.lane.b32.xlu0 %v18, 15
  %v192 = vpop.permute.xlu0 %191
  %193 = vrot.lane.b32.xlu0 %v20, 15
  %v194 = vpop.permute.xlu0 %193
  %195 = vrot.lane.b32.xlu0 %v22, 15
  %v196 = vpop.permute.xlu0 %195
  %197 = vrot.lane.b32.xlu0 %v24, 15
  %v198 = vpop.permute.xlu0 %197
  %vm199 = vcmp.lt.s32.totalorder %v76, 15
  %v200 = vsel %vm199, %v184, %v192
  %v201 = vsel %vm199, %v186, %v194
  %v202 = vsel %vm199, %v188, %v196
  %v203 = vsel %vm199, %v190, %v198
  %v204 = vsel %vm199, %v192, %v184
  %v205 = vsel %vm199, %v194, %v186
  %v206 = vsel %vm199, %v196, %v188
  %v207 = vsel %vm199, %v198, %v190
  %v208 = vperm.slane %v43, 2
  %v209 = vperm.slane %v44, 2
  %v210 = vmul.f32 %v204, %v208
  %v211 = vmul.f32 %v200, %v209
  %v212 = vmul.f32 %v205, %v208
  %v213 = vmul.f32 %v201, %v209
  %v214 = vmul.f32 %v206, %v208
  %v215 = vmul.f32 %v202, %v209
  %v216 = vmul.f32 %v207, %v208
  %v217 = vmul.f32 %v203, %v209
  %219 = vset.pattern.permute.xlu0 0
  %220 = vperm.xlu0 %219, %v29
  %v221 = vpop.permute.xlu0 %220
  %224 = vset.pattern.permute.xlu0 0
  %225 = vperm.xlu0 %224, %v30
  %v226 = vpop.permute.xlu0 %225
  %v228 = vmul.f32 %v210, %v221
  %v229 = vmul.f32 %v211, %v221
  %v230 = vmul.f32 %v212, %v226
  %v231 = vmul.f32 %v213, %v226
  %v232 = vmul.f32 %v214, %v221
  %v233 = vmul.f32 %v215, %v221
  %v234 = vmul.f32 %v216, %v226
  %v235 = vmul.f32 %v217, %v226
  %v236 = vadd.f32 %v175, %v228
  %v237 = vadd.f32 %v176, %v229
  %v238 = vadd.f32 %v177, %v230
  %v239 = vadd.f32 %v178, %v231
  %v240 = vadd.f32 %v179, %v232
  %v241 = vadd.f32 %v180, %v233
  %v242 = vadd.f32 %v181, %v234
  %v243 = vadd.f32 %v182, %v235
  %244 = vrot.lane.b32.xlu0 %v17, 1
  %v245 = vpop.permute.xlu0 %244
  %246 = vrot.lane.b32.xlu0 %v19, 1
  %v247 = vpop.permute.xlu0 %246
  %248 = vrot.lane.b32.xlu0 %v21, 1
  %v249 = vpop.permute.xlu0 %248
  %250 = vrot.lane.b32.xlu0 %v23, 1
  %v251 = vpop.permute.xlu0 %250
  %252 = vrot.lane.b32.xlu0 %v18, 1
  %v253 = vpop.permute.xlu0 %252
  %254 = vrot.lane.b32.xlu0 %v20, 1
  %v255 = vpop.permute.xlu0 %254
  %256 = vrot.lane.b32.xlu0 %v22, 1
  %v257 = vpop.permute.xlu0 %256
  %258 = vrot.lane.b32.xlu0 %v24, 1
  %v259 = vpop.permute.xlu0 %258
  %vm260 = vcmp.lt.s32.totalorder %v76, 1
  %v261 = vsel %vm260, %v245, %v253
  %v262 = vsel %vm260, %v247, %v255
  %v263 = vsel %vm260, %v249, %v257
  %v264 = vsel %vm260, %v251, %v259
  %v265 = vsel %vm260, %v253, %v245
  %v266 = vsel %vm260, %v255, %v247
  %v267 = vsel %vm260, %v257, %v249
  %v268 = vsel %vm260, %v259, %v251
  %v269 = vperm.slane %v43, 3
  %v270 = vperm.slane %v44, 3
  %v271 = vmul.f32 %v265, %v269
  %v272 = vmul.f32 %v261, %v270
  %v273 = vmul.f32 %v266, %v269
  %v274 = vmul.f32 %v262, %v270
  %v275 = vmul.f32 %v267, %v269
  %v276 = vmul.f32 %v263, %v270
  %v277 = vmul.f32 %v268, %v269
  %v278 = vmul.f32 %v264, %v270
  %280 = vset.pattern.permute.xlu0 0
  %281 = vperm.xlu0 %280, %v31
  %v282 = vpop.permute.xlu0 %281
  %285 = vset.pattern.permute.xlu0 0
  %286 = vperm.xlu0 %285, %v32
  %v287 = vpop.permute.xlu0 %286
  %v289 = vmul.f32 %v271, %v282
  %v290 = vmul.f32 %v272, %v282
  %v291 = vmul.f32 %v273, %v287
  %v292 = vmul.f32 %v274, %v287
  %v293 = vmul.f32 %v275, %v282
  %v294 = vmul.f32 %v276, %v282
  %v295 = vmul.f32 %v277, %v287
  %v296 = vmul.f32 %v278, %v287
  %v297 = vadd.f32 %v236, %v289
  %v298 = vadd.f32 %v237, %v290
  %v299 = vadd.f32 %v238, %v291
  %v300 = vadd.f32 %v239, %v292
  %v301 = vadd.f32 %v240, %v293
  %v302 = vadd.f32 %v241, %v294
  %v303 = vadd.f32 %v242, %v295
  %v304 = vadd.f32 %v243, %v296
  %306 = vset.pattern.permute.xlu0 0
  %307 = vperm.xlu0 %306, %v33
  %v308 = vpop.permute.xlu0 %307
  %311 = vset.pattern.permute.xlu0 0
  %312 = vperm.xlu0 %311, %v34
  %v313 = vpop.permute.xlu0 %312
  %v315 = vmul.f32 %v17, %v308
  %v316 = vmul.f32 %v18, %v308
  %v317 = vmul.f32 %v19, %v313
  %v318 = vmul.f32 %v20, %v313
  %v319 = vmul.f32 %v21, %v308
  %v320 = vmul.f32 %v22, %v308
  %v321 = vmul.f32 %v23, %v313
  %v322 = vmul.f32 %v24, %v313
  %v323 = vadd.f32 %v297, %v315
  %v324 = vadd.f32 %v298, %v316
  %v325 = vadd.f32 %v299, %v317
  %v326 = vadd.f32 %v300, %v318
  %v327 = vadd.f32 %v301, %v319
  %v328 = vadd.f32 %v302, %v320
  %v329 = vadd.f32 %v303, %v321
  %v330 = vadd.f32 %v304, %v322
  %331 = vrot.lane.b32.xlu0 %v17, 127
  %v332 = vpop.permute.xlu0 %331
  %333 = vrot.lane.b32.xlu0 %v19, 127
  %v334 = vpop.permute.xlu0 %333
  %335 = vrot.lane.b32.xlu0 %v21, 127
  %v336 = vpop.permute.xlu0 %335
  %337 = vrot.lane.b32.xlu0 %v23, 127
  %v338 = vpop.permute.xlu0 %337
  %339 = vrot.lane.b32.xlu0 %v18, 127
  %v340 = vpop.permute.xlu0 %339
  %341 = vrot.lane.b32.xlu0 %v20, 127
  %v342 = vpop.permute.xlu0 %341
  %343 = vrot.lane.b32.xlu0 %v22, 127
  %v344 = vpop.permute.xlu0 %343
  %345 = vrot.lane.b32.xlu0 %v24, 127
  %v346 = vpop.permute.xlu0 %345
  %vm347 = vcmp.lt.s32.totalorder %v76, 127
  %v348 = vsel %vm347, %v332, %v340
  %v349 = vsel %vm347, %v334, %v342
  %v350 = vsel %vm347, %v336, %v344
  %v351 = vsel %vm347, %v338, %v346
  %v352 = vsel %vm347, %v340, %v332
  %v353 = vsel %vm347, %v342, %v334
  %v354 = vsel %vm347, %v344, %v336
  %v355 = vsel %vm347, %v346, %v338
  %v356 = vperm.slane %v43, 5
  %v357 = vperm.slane %v44, 5
  %v358 = vmul.f32 %v348, %v356
  %v359 = vmul.f32 %v352, %v357
  %v360 = vmul.f32 %v349, %v356
  %v361 = vmul.f32 %v353, %v357
  %v362 = vmul.f32 %v350, %v356
  %v363 = vmul.f32 %v354, %v357
  %v364 = vmul.f32 %v351, %v356
  %v365 = vmul.f32 %v355, %v357
  %367 = vset.pattern.permute.xlu0 0
  %368 = vperm.xlu0 %367, %v35
  %v369 = vpop.permute.xlu0 %368
  %372 = vset.pattern.permute.xlu0 0
  %373 = vperm.xlu0 %372, %v36
  %v374 = vpop.permute.xlu0 %373
  %v376 = vmul.f32 %v358, %v369
  %v377 = vmul.f32 %v359, %v369
  %v378 = vmul.f32 %v360, %v374
  %v379 = vmul.f32 %v361, %v374
  %v380 = vmul.f32 %v362, %v369
  %v381 = vmul.f32 %v363, %v369
  %v382 = vmul.f32 %v364, %v374
  %v383 = vmul.f32 %v365, %v374
  %v384 = vadd.f32 %v323, %v376
  %v385 = vadd.f32 %v324, %v377
  %v386 = vadd.f32 %v325, %v378
  %v387 = vadd.f32 %v326, %v379
  %v388 = vadd.f32 %v327, %v380
  %v389 = vadd.f32 %v328, %v381
  %v390 = vadd.f32 %v329, %v382
  %v391 = vadd.f32 %v330, %v383
  %392 = vrot.lane.b32.xlu0 %v17, 113
  %v393 = vpop.permute.xlu0 %392
  %394 = vrot.lane.b32.xlu0 %v19, 113
  %v395 = vpop.permute.xlu0 %394
  %396 = vrot.lane.b32.xlu0 %v21, 113
  %v397 = vpop.permute.xlu0 %396
  %398 = vrot.lane.b32.xlu0 %v23, 113
  %v399 = vpop.permute.xlu0 %398
  %400 = vrot.lane.b32.xlu0 %v18, 113
  %v401 = vpop.permute.xlu0 %400
  %402 = vrot.lane.b32.xlu0 %v20, 113
  %v403 = vpop.permute.xlu0 %402
  %404 = vrot.lane.b32.xlu0 %v22, 113
  %v405 = vpop.permute.xlu0 %404
  %406 = vrot.lane.b32.xlu0 %v24, 113
  %v407 = vpop.permute.xlu0 %406
  %vm408 = vcmp.lt.s32.totalorder %v76, 113
  %v409 = vsel %vm408, %v393, %v401
  %v410 = vsel %vm408, %v395, %v403
  %v411 = vsel %vm408, %v397, %v405
  %v412 = vsel %vm408, %v399, %v407
  %v413 = vsel %vm408, %v401, %v393
  %v414 = vsel %vm408, %v403, %v395
  %v415 = vsel %vm408, %v405, %v397
  %v416 = vsel %vm408, %v407, %v399
  %v417 = vperm.slane %v43, 6
  %v418 = vperm.slane %v44, 6
  %v419 = vmul.f32 %v409, %v417
  %v420 = vmul.f32 %v413, %v418
  %v421 = vmul.f32 %v410, %v417
  %v422 = vmul.f32 %v414, %v418
  %v423 = vmul.f32 %v411, %v417
  %v424 = vmul.f32 %v415, %v418
  %v425 = vmul.f32 %v412, %v417
  %v426 = vmul.f32 %v416, %v418
  %428 = vset.pattern.permute.xlu0 0
  %429 = vperm.xlu0 %428, %v37
  %v430 = vpop.permute.xlu0 %429
  %433 = vset.pattern.permute.xlu0 0
  %434 = vperm.xlu0 %433, %v38
  %v435 = vpop.permute.xlu0 %434
  %v437 = vmul.f32 %v419, %v430
  %v438 = vmul.f32 %v420, %v430
  %v439 = vmul.f32 %v421, %v435
  %v440 = vmul.f32 %v422, %v435
  %v441 = vmul.f32 %v423, %v430
  %v442 = vmul.f32 %v424, %v430
  %v443 = vmul.f32 %v425, %v435
  %v444 = vmul.f32 %v426, %v435
  %v445 = vadd.f32 %v384, %v437
  %v446 = vadd.f32 %v385, %v438
  %v447 = vadd.f32 %v386, %v439
  %v448 = vadd.f32 %v387, %v440
  %v449 = vadd.f32 %v388, %v441
  %v450 = vadd.f32 %v389, %v442
  %v451 = vadd.f32 %v390, %v443
  %v452 = vadd.f32 %v391, %v444
  %453 = vrot.lane.b32.xlu0 %v17, 112
  %v454 = vpop.permute.xlu0 %453
  %455 = vrot.lane.b32.xlu0 %v19, 112
  %v456 = vpop.permute.xlu0 %455
  %457 = vrot.lane.b32.xlu0 %v21, 112
  %v458 = vpop.permute.xlu0 %457
  %459 = vrot.lane.b32.xlu0 %v23, 112
  %v460 = vpop.permute.xlu0 %459
  %461 = vrot.lane.b32.xlu0 %v18, 112
  %v462 = vpop.permute.xlu0 %461
  %463 = vrot.lane.b32.xlu0 %v20, 112
  %v464 = vpop.permute.xlu0 %463
  %465 = vrot.lane.b32.xlu0 %v22, 112
  %v466 = vpop.permute.xlu0 %465
  %467 = vrot.lane.b32.xlu0 %v24, 112
  %v468 = vpop.permute.xlu0 %467
  %vm469 = vcmp.lt.s32.totalorder %v76, 112
  %v470 = vsel %vm469, %v454, %v462
  %v471 = vsel %vm469, %v456, %v464
  %v472 = vsel %vm469, %v458, %v466
  %v473 = vsel %vm469, %v460, %v468
  %v474 = vsel %vm469, %v462, %v454
  %v475 = vsel %vm469, %v464, %v456
  %v476 = vsel %vm469, %v466, %v458
  %v477 = vsel %vm469, %v468, %v460
  %v478 = vperm.slane %v43, 7
  %v479 = vperm.slane %v44, 7
  %v480 = vmul.f32 %v470, %v478
  %v481 = vmul.f32 %v474, %v479
  %v482 = vmul.f32 %v471, %v478
  %v483 = vmul.f32 %v475, %v479
  %v484 = vmul.f32 %v472, %v478
  %v485 = vmul.f32 %v476, %v479
  %v486 = vmul.f32 %v473, %v478
  %v487 = vmul.f32 %v477, %v479
  %489 = vset.pattern.permute.xlu0 0
  %490 = vperm.xlu0 %489, %v39
  %v491 = vpop.permute.xlu0 %490
  %494 = vset.pattern.permute.xlu0 0
  %495 = vperm.xlu0 %494, %v40
  %v496 = vpop.permute.xlu0 %495
  %v498 = vmul.f32 %v480, %v491
  %v499 = vmul.f32 %v481, %v491
  %v500 = vmul.f32 %v482, %v496
  %v501 = vmul.f32 %v483, %v496
  %v502 = vmul.f32 %v484, %v491
  %v503 = vmul.f32 %v485, %v491
  %v504 = vmul.f32 %v486, %v496
  %v505 = vmul.f32 %v487, %v496
  %v506 = vadd.f32 %v445, %v498
  %v507 = vadd.f32 %v446, %v499
  %v508 = vadd.f32 %v447, %v500
  %v509 = vadd.f32 %v448, %v501
  %v510 = vadd.f32 %v449, %v502
  %v511 = vadd.f32 %v450, %v503
  %v512 = vadd.f32 %v451, %v504
  %v513 = vadd.f32 %v452, %v505
  %514 = vrot.lane.b32.xlu0 %v17, 111
  %v515 = vpop.permute.xlu0 %514
  %516 = vrot.lane.b32.xlu0 %v19, 111
  %v517 = vpop.permute.xlu0 %516
  %518 = vrot.lane.b32.xlu0 %v21, 111
  %v519 = vpop.permute.xlu0 %518
  %520 = vrot.lane.b32.xlu0 %v23, 111
  %v521 = vpop.permute.xlu0 %520
  %522 = vrot.lane.b32.xlu0 %v18, 111
  %v523 = vpop.permute.xlu0 %522
  %524 = vrot.lane.b32.xlu0 %v20, 111
  %v525 = vpop.permute.xlu0 %524
  %526 = vrot.lane.b32.xlu0 %v22, 111
  %v527 = vpop.permute.xlu0 %526
  %528 = vrot.lane.b32.xlu0 %v24, 111
  %v529 = vpop.permute.xlu0 %528
  %vm530 = vcmp.lt.s32.totalorder %v76, 111
  %v531 = vsel %vm530, %v515, %v523
  %v532 = vsel %vm530, %v517, %v525
  %v533 = vsel %vm530, %v519, %v527
  %v534 = vsel %vm530, %v521, %v529
  %v535 = vsel %vm530, %v523, %v515
  %v536 = vsel %vm530, %v525, %v517
  %v537 = vsel %vm530, %v527, %v519
  %v538 = vsel %vm530, %v529, %v521
  %v539 = vperm.slane %v45, 0
  %v540 = vperm.slane %v46, 0
  %v541 = vmul.f32 %v531, %v539
  %v542 = vmul.f32 %v535, %v540
  %v543 = vmul.f32 %v532, %v539
  %v544 = vmul.f32 %v536, %v540
  %v545 = vmul.f32 %v533, %v539
  %v546 = vmul.f32 %v537, %v540
  %v547 = vmul.f32 %v534, %v539
  %v548 = vmul.f32 %v538, %v540
  %550 = vset.pattern.permute.xlu0 0
  %551 = vperm.xlu0 %550, %v41
  %v552 = vpop.permute.xlu0 %551
  %555 = vset.pattern.permute.xlu0 0
  %556 = vperm.xlu0 %555, %v42
  %v557 = vpop.permute.xlu0 %556
  %v559 = vmul.f32 %v541, %v552
  %v560 = vmul.f32 %v542, %v552
  %v561 = vmul.f32 %v543, %v557
  %v562 = vmul.f32 %v544, %v557
  %v563 = vmul.f32 %v545, %v552
  %v564 = vmul.f32 %v546, %v552
  %v565 = vmul.f32 %v547, %v557
  %v566 = vmul.f32 %v548, %v557
  %v567 = vadd.f32 %v506, %v559
  %v568 = vadd.f32 %v507, %v560
  %v569 = vadd.f32 %v508, %v561
  %v570 = vadd.f32 %v509, %v562
  %v571 = vadd.f32 %v510, %v563
  %v572 = vadd.f32 %v511, %v564
  %v573 = vadd.f32 %v512, %v565
  %v574 = vadd.f32 %v513, %v566
  %575 = vst [vmem:[%s4] sm:$0xff] %v567
  %576 = vst [vmem:[%s4 + $0x8] sm:$0xff] %v568
  %577 = vst [vmem:[%s4 + $0x10] sm:$0xff] %v569
  %578 = vst [vmem:[%s4 + $0x18] sm:$0xff] %v570
  %579 = vst [vmem:[%s4 + $0x20] sm:$0xff] %v571
  %580 = vst [vmem:[%s4 + $0x28] sm:$0xff] %v572
  %581 = vst [vmem:[%s4 + $0x30] sm:$0xff] %v573
  %582 = vst [vmem:[%s4 + $0x38] sm:$0xff] %v574
  // Predicated region
  $region18: #{self_conv2d_forward.3} parent=0 // pred_check
    _
  $region19: #{self_conv2d_forward.3} parent=0 // pred_check_branch
    %584 = sbr.rel (0) target = $region21
  $region20: #{self_conv2d_forward.3} parent=0 // pred_region
    _
  $region21: #{self_conv2d_forward.3} parent=0 // pred_fallthru
    _
  // Predicated region
  $region22: #{self_conv2d_forward.3} parent=0 // pred_check
    _
  $region23: #{self_conv2d_forward.3} parent=0 // pred_check_branch
    %586 = sbr.rel (0) target = $region25
  $region24: #{self_conv2d_forward.3} parent=0 // pred_region
    _
  $region25: #{self_conv2d_forward.3} parent=0 // pred_fallthru
    _

// kernel: self_conv2d_forward.2
$region0: #{self_conv2d_forward.2}
  #allocation0 [shape = 'u32[]', space=smem, size = 0x4, offset = 0x4, fixed_abs, tag = 'smem constant byte address 0x4 - core index']
  #allocation1 [shape = 'u32[72,128]{1,0:T(1,128)}', space=vmem, size = 0x9000, scoped, tag = 'internal scratch']
  %s0 = inlined_call_operand.vmem [shape: bf16[16,512], index: 0, kind: input, shape index: {}]
  %s1 = inlined_call_operand.vmem [shape: bf16[48,16], index: 1, kind: input, shape index: {}]
  %s2 = inlined_call_operand.vmem [shape: bf16[256,9], index: 2, kind: input, shape index: {}]
  %s3 = inlined_call_operand.vmem [shape: f32[1,16,9], index: 3, kind: output, shape index: {}]
  %s4 = sld [smem:[#allocation0]]
  $region26: #{self_conv2d_forward.2} parent=0
    _
  %s6 = ssub.s32 1, %s4
  %s7 = scalar_select 0, %s6, %s4
  // Predicated region
  $region2: #{self_conv2d_forward.2} parent=0 // pred_check
    _
  $region3: #{self_conv2d_forward.2} parent=0 // pred_check_branch
    %9 = sbr.rel (0) target = $region5
  $region4: #{self_conv2d_forward.2} parent=0 // pred_region
    %s10 = sadd.s32 0, 0
    %s11 = smul.u32 4, %s10
    %p12 = scmp.lt.s32.totalorder %s11, 3
    %s13 = scalar_select %p12, %s11, 3
    %s14 = smul.addr %s13, 4
    %s15 = scalar_lea.vmem %s0, %s14
    %s16 = sadd.s32 0, 0
    %s17 = smul.u32 4, %s16
  $region5: #{self_conv2d_forward.2} parent=0 // pred_fallthru
    _
  // Predicated region
  $region6: #{self_conv2d_forward.2} parent=0 // pred_check
    _
  $region7: #{self_conv2d_forward.2} parent=0 // pred_check_branch
    %19 = sbr.rel (0) target = $region9
  $region8: #{self_conv2d_forward.2} parent=0 // pred_region
    _
  $region9: #{self_conv2d_forward.2} parent=0 // pred_fallthru
    _
  // Predicated region
  $region10: #{self_conv2d_forward.2} parent=0 // pred_check
    _
  $region11: #{self_conv2d_forward.2} parent=0 // pred_check_branch
    %21 = sbr.rel (0) target = $region13
  $region12: #{self_conv2d_forward.2} parent=0 // pred_region
    _
  $region13: #{self_conv2d_forward.2} parent=0 // pred_fallthru
    _
  %s22 = sadd.s32 0, 0
  %s23 = smul.u32 4, %s22
  %p24 = scmp.lt.s32.totalorder %s23, 3
  %s25 = scalar_select %p24, %s23, 3
  %s26 = smul.addr %s25, 4
  %s27 = scalar_lea.vmem %s0, %s26
  %s28 = sadd.s32 0, 0
  %s29 = smul.u32 4, %s28
  %p30 = scmp.lt.s32.totalorder %s29, 3
  %s31 = scalar_select %p30, %s29, 3
  %s32 = smul.addr %s31, 4
  %s33 = scalar_lea.vmem %s0, %s32
  %s34 = sadd.s32 0, 0
  %s35 = smul.u32 4, %s34
  %p37 = scmp.eq.s32.totalorder 0, 0
  // Predicated region
  $region14: #{self_conv2d_forward.2} parent=0 // pred_check
    %p38 = pneg %p37
  $region15: #{self_conv2d_forward.2} parent=0 // pred_check_branch
    %40 = sbr.rel (%p38) target = $region17
  $region16: #{self_conv2d_forward.2} parent=0 // pred_region
    %vm41 = vcmask 72704
    %42 = vst.msk [vmem:[%s3] sm:$0xff] %vm41, 0.0
    %43 = vst.msk [vmem:[%s3 + $0x8] sm:$0xff] %vm41, 0.0
  $region17: #{self_conv2d_forward.2} parent=0 // pred_fallthru
    _
  %v44 = vld [vmem:[%s1] sm:$0xf]
  %v45 = vld [vmem:[%s1 + $0x4] sm:$0xf]
  %v46 = vld [vmem:[%s1 + $0x8] sm:$0xf]
  %v47 = vld [vmem:[%s1 + $0xc] sm:$0xf]
  %v48 = vld [vmem:[%s1 + $0x10] sm:$0xf]
  %v49 = vld [vmem:[%s1 + $0x14] sm:$0xf]
  %v50 = vld [vmem:[%s33] sm:$0xff]
  %v51 = vld [vmem:[%s33 + $0x8] sm:$0xff]
  %v52 = vld [vmem:[%s33 + $0x10] sm:$0xff]
  %v53 = vld [vmem:[%s33 + $0x18] sm:$0xff]
  %v60 = vunpack.c.l.b16 %v44
  %v61 = vunpack.c.l.b16 %v45
  %v62 = vunpack.c.l.b16 %v46
  %v63 = vunpack.c.l.b16 %v47
  %v64 = vunpack.c.l.b16 %v48
  %v65 = vunpack.c.l.b16 %v49
  %v66 = vpack.c.b16 %v61, %v60
  %v67 = vpack.c.b16 %v63, %v62
  %v68 = vpack.c.b16 %v65, %v64
  %v73 = vunpack.c.l.b16 %v50
  %v74 = vunpack.c.h.b16 %v50
  %v75 = vunpack.c.l.b16 %v51
  %v76 = vunpack.c.h.b16 %v51
  %v77 = vunpack.c.l.b16 %v52
  %v78 = vunpack.c.h.b16 %v52
  %v79 = vunpack.c.l.b16 %v53
  %v80 = vunpack.c.h.b16 %v53
  %v81 = vpack.c.b16 %v77, %v73
  %v82 = vpack.c.b16 %v78, %v74
  %v83 = vpack.c.b16 %v79, %v75
  %v84 = vpack.c.b16 %v80, %v76
  %vm89 = vcmask 130048
  %v91 = vsel %vm89, %v66, 0
  %v94 = vsel %vm89, %v67, 0
  %v97 = vsel %vm89, %v68, 0
  %99 = vmatpush.bf16.msra.mxu0 0
  %100 = vmatpush.bf16.msra.mxu0 0
  %101 = vmatpush.bf16.msra.mxu0 0
  %102 = vmatpush.bf16.msra.mxu0 0
  %103 = vmatpush.bf16.msra.mxu0 0
  %104 = vmatpush.bf16.msra.mxu0 0
  %105 = vmatpush.bf16.msra.mxu0 0
  %106 = vmatpush.bf16.msra.mxu0 %v81
  %107 = vmatmul.bf16.gmra.mxu0 %v91
  %v108 = vpop.f32.mrf.mxu0
  %v109 = vadd.f32 0.0, %v108
  %v110 = vpop.f32.mrf.mxu0
  %v111 = vadd.f32 0.0, %v110
  %112 = vmatmul.bf16.gmra.mxu0 %v94
  %v113 = vpop.f32.mrf.mxu0
  %v114 = vadd.f32 0.0, %v113
  %v115 = vpop.f32.mrf.mxu0
  %v116 = vadd.f32 0.0, %v115
  %117 = vmatmul.bf16.gmra.mxu0 %v97
  %v118 = vpop.f32.mrf.mxu0
  %v119 = vadd.f32 0.0, %v118
  %v120 = vpop.f32.mrf.mxu0
  %v121 = vadd.f32 0.0, %v120
  %122 = vdwg.mxu0
  %123 = vmatpush.bf16.msra.mxu0 0
  %124 = vmatpush.bf16.msra.mxu0 0
  %125 = vmatpush.bf16.msra.mxu0 0
  %126 = vmatpush.bf16.msra.mxu0 0
  %127 = vmatpush.bf16.msra.mxu0 0
  %128 = vmatpush.bf16.msra.mxu0 0
  %129 = vmatpush.bf16.msra.mxu0 0
  %130 = vmatpush.bf16.msra.mxu0 %v82
  %131 = vmatmul.bf16.gmra.mxu0 %v91
  %v132 = vpop.f32.mrf.mxu0
  %v133 = vadd.f32 0.0, %v132
  %v134 = vpop.f32.mrf.mxu0
  %v135 = vadd.f32 0.0, %v134
  %136 = vmatmul.bf16.gmra.mxu0 %v94
  %v137 = vpop.f32.mrf.mxu0
  %v138 = vadd.f32 0.0, %v137
  %v139 = vpop.f32.mrf.mxu0
  %v140 = vadd.f32 0.0, %v139
  %141 = vmatmul.bf16.gmra.mxu0 %v97
  %v142 = vpop.f32.mrf.mxu0
  %v143 = vadd.f32 0.0, %v142
  %v144 = vpop.f32.mrf.mxu0
  %v145 = vadd.f32 0.0, %v144
  %146 = vdwg.mxu0
  %147 = vmatpush.bf16.msra.mxu0 0
  %148 = vmatpush.bf16.msra.mxu0 0
  %149 = vmatpush.bf16.msra.mxu0 0
  %150 = vmatpush.bf16.msra.mxu0 0
  %151 = vmatpush.bf16.msra.mxu0 0
  %152 = vmatpush.bf16.msra.mxu0 0
  %153 = vmatpush.bf16.msra.mxu0 0
  %154 = vmatpush.bf16.msra.mxu0 %v83
  %155 = vmatmul.bf16.gmra.mxu0 %v91
  %v156 = vpop.f32.mrf.mxu0
  %v157 = vadd.f32 0.0, %v156
  %v158 = vpop.f32.mrf.mxu0
  %v159 = vadd.f32 0.0, %v158
  %160 = vmatmul.bf16.gmra.mxu0 %v94
  %v161 = vpop.f32.mrf.mxu0
  %v162 = vadd.f32 0.0, %v161
  %v163 = vpop.f32.mrf.mxu0
  %v164 = vadd.f32 0.0, %v163
  %165 = vmatmul.bf16.gmra.mxu0 %v97
  %v166 = vpop.f32.mrf.mxu0
  %v167 = vadd.f32 0.0, %v166
  %v168 = vpop.f32.mrf.mxu0
  %v169 = vadd.f32 0.0, %v168
  %170 = vdwg.mxu0
  %171 = vmatpush.bf16.msra.mxu0 0
  %172 = vmatpush.bf16.msra.mxu0 0
  %173 = vmatpush.bf16.msra.mxu0 0
  %174 = vmatpush.bf16.msra.mxu0 0
  %175 = vmatpush.bf16.msra.mxu0 0
  %176 = vmatpush.bf16.msra.mxu0 0
  %177 = vmatpush.bf16.msra.mxu0 0
  %178 = vmatpush.bf16.msra.mxu0 %v84
  %179 = vmatmul.bf16.gmra.mxu0 %v91
  %v180 = vpop.f32.mrf.mxu0
  %v181 = vadd.f32 0.0, %v180
  %v182 = vpop.f32.mrf.mxu0
  %v183 = vadd.f32 0.0, %v182
  %184 = vmatmul.bf16.gmra.mxu0 %v94
  %v185 = vpop.f32.mrf.mxu0
  %v186 = vadd.f32 0.0, %v185
  %v187 = vpop.f32.mrf.mxu0
  %v188 = vadd.f32 0.0, %v187
  %189 = vmatmul.bf16.gmra.mxu0 %v97
  %v190 = vpop.f32.mrf.mxu0
  %v191 = vadd.f32 0.0, %v190
  %v192 = vpop.f32.mrf.mxu0
  %v193 = vadd.f32 0.0, %v192
  %194 = vdwg.mxu0
  %v195 = vpack.c.bf16 %v133, %v109
  %v196 = vpack.c.bf16 %v181, %v157
  %v197 = vpack.c.bf16 %v135, %v111
  %v198 = vpack.c.bf16 %v183, %v159
  %v199 = vpack.c.bf16 %v138, %v114
  %v200 = vpack.c.bf16 %v186, %v162
  %v201 = vpack.c.bf16 %v140, %v116
  %v202 = vpack.c.bf16 %v188, %v164
  %v203 = vpack.c.bf16 %v143, %v119
  %v204 = vpack.c.bf16 %v191, %v167
  %v205 = vpack.c.bf16 %v145, %v121
  %v206 = vpack.c.bf16 %v193, %v169
  %v207 = vld [vmem:[%s2] sm:$0xf]
  %v208 = vld [vmem:[%s2 + $0x4] sm:$0xf]
  %v209 = vld [vmem:[%s2 + $0x8] sm:$0xf]
  %v210 = vld [vmem:[%s2 + $0xc] sm:$0xf]
  %v211 = vld [vmem:[%s2 + $0x10] sm:$0xf]
  %v212 = vld [vmem:[%s2 + $0x14] sm:$0xf]
  %v213 = vld [vmem:[%s2 + $0x18] sm:$0xf]
  %v214 = vld [vmem:[%s2 + $0x1c] sm:$0xf]
  %v215 = vld [vmem:[%s2 + $0x20] sm:$0xf]
  %v216 = vld [vmem:[%s2 + $0x24] sm:$0xf]
  %v217 = vld [vmem:[%s2 + $0x28] sm:$0xf]
  %v218 = vld [vmem:[%s2 + $0x2c] sm:$0xf]
  %v219 = vld [vmem:[%s2 + $0x30] sm:$0xf]
  %v220 = vld [vmem:[%s2 + $0x34] sm:$0xf]
  %v221 = vld [vmem:[%s2 + $0x38] sm:$0xf]
  %v222 = vld [vmem:[%s2 + $0x3c] sm:$0xf]
  %v223 = vld [vmem:[%s2 + $0x40] sm:$0xf]
  %v224 = vld [vmem:[%s2 + $0x44] sm:$0xf]
  %v225 = vld [vmem:[%s2 + $0x48] sm:$0xf]
  %v226 = vld [vmem:[%s2 + $0x4c] sm:$0xf]
  %v227 = vld [vmem:[%s2 + $0x50] sm:$0xf]
  %v228 = vld [vmem:[%s2 + $0x54] sm:$0xf]
  %v229 = vld [vmem:[%s2 + $0x58] sm:$0xf]
  %v230 = vld [vmem:[%s2 + $0x5c] sm:$0xf]
  %v231 = vld [vmem:[%s2 + $0x60] sm:$0xf]
  %v232 = vld [vmem:[%s2 + $0x64] sm:$0xf]
  %v233 = vld [vmem:[%s2 + $0x68] sm:$0xf]
  %v234 = vld [vmem:[%s2 + $0x6c] sm:$0xf]
  %v235 = vld [vmem:[%s2 + $0x70] sm:$0xf]
  %v236 = vld [vmem:[%s2 + $0x74] sm:$0xf]
  %v237 = vld [vmem:[%s2 + $0x78] sm:$0xf]
  %v238 = vld [vmem:[%s2 + $0x7c] sm:$0xf]
  %v241 = vunpack.c.l.b16 %v203
  %v242 = vunpack.c.h.b16 %v203
  %v243 = vunpack.c.l.b16 %v205
  %v244 = vunpack.c.h.b16 %v205
  %v245 = vpack.c.b16 %v243, %v241
  %v246 = vpack.c.b16 %v244, %v242
  %v281 = vunpack.c.l.b16 %v207
  %v282 = vunpack.c.l.b16 %v208
  %v283 = vunpack.c.l.b16 %v209
  %v284 = vunpack.c.l.b16 %v210
  %v285 = vunpack.c.l.b16 %v211
  %v286 = vunpack.c.l.b16 %v212
  %v287 = vunpack.c.l.b16 %v213
  %v288 = vunpack.c.l.b16 %v214
  %v289 = vunpack.c.l.b16 %v215
  %v290 = vunpack.c.l.b16 %v216
  %v291 = vunpack.c.l.b16 %v217
  %v292 = vunpack.c.l.b16 %v218
  %v293 = vunpack.c.l.b16 %v219
  %v294 = vunpack.c.l.b16 %v220
  %v295 = vunpack.c.l.b16 %v221
  %v296 = vunpack.c.l.b16 %v222
  %v297 = vunpack.c.l.b16 %v223
  %v298 = vunpack.c.l.b16 %v224
  %v299 = vunpack.c.l.b16 %v225
  %v300 = vunpack.c.l.b16 %v226
  %v301 = vunpack.c.l.b16 %v227
  %v302 = vunpack.c.l.b16 %v228
  %v303 = vunpack.c.l.b16 %v229
  %v304 = vunpack.c.l.b16 %v230
  %v305 = vunpack.c.l.b16 %v231
  %v306 = vunpack.c.l.b16 %v232
  %v307 = vunpack.c.l.b16 %v233
  %v308 = vunpack.c.l.b16 %v234
  %v309 = vunpack.c.l.b16 %v235
  %v310 = vunpack.c.l.b16 %v236
  %v311 = vunpack.c.l.b16 %v237
  %v312 = vunpack.c.l.b16 %v238
  %v313 = vpack.c.b16 %v282, %v281
  %v314 = vpack.c.b16 %v284, %v283
  %v315 = vpack.c.b16 %v286, %v285
  %v316 = vpack.c.b16 %v288, %v287
  %v317 = vpack.c.b16 %v290, %v289
  %v318 = vpack.c.b16 %v292, %v291
  %v319 = vpack.c.b16 %v294, %v293
  %v320 = vpack.c.b16 %v296, %v295
  %v321 = vpack.c.b16 %v298, %v297
  %v322 = vpack.c.b16 %v300, %v299
  %v323 = vpack.c.b16 %v302, %v301
  %v324 = vpack.c.b16 %v304, %v303
  %v325 = vpack.c.b16 %v306, %v305
  %v326 = vpack.c.b16 %v308, %v307
  %v327 = vpack.c.b16 %v310, %v309
  %v328 = vpack.c.b16 %v312, %v311
  %345 = vmatpush.bf16.msra.mxu0 %v320
  %346 = vmatpush.bf16.msra.mxu0 %v319
  %347 = vmatpush.bf16.msra.mxu0 %v318
  %348 = vmatpush.bf16.msra.mxu0 %v317
  %349 = vmatpush.bf16.msra.mxu0 %v316
  %350 = vmatpush.bf16.msra.mxu0 %v315
  %351 = vmatpush.bf16.msra.mxu0 %v314
  %352 = vmatpush.bf16.msra.mxu0 %v313
  %353 = vmatmul.bf16.gmra.mxu0 %v245
  %v354 = vpop.f32.mrf.mxu0
  %v355 = vadd.f32 0.0, %v354
  %v356 = vpop.f32.mrf.mxu0
  %v357 = vadd.f32 0.0, %v356
  %358 = vdwg.mxu0
  %359 = vmatpush.bf16.msra.mxu0 %v328
  %360 = vmatpush.bf16.msra.mxu0 %v327
  %361 = vmatpush.bf16.msra.mxu0 %v326
  %362 = vmatpush.bf16.msra.mxu0 %v325
  %363 = vmatpush.bf16.msra.mxu0 %v324
  %364 = vmatpush.bf16.msra.mxu0 %v323
  %365 = vmatpush.bf16.msra.mxu0 %v322
  %366 = vmatpush.bf16.msra.mxu0 %v321
  %367 = vmatmul.bf16.gmra.mxu0 %v246
  %v368 = vpop.f32.mrf.mxu0
  %v369 = vadd.f32 %v355, %v368
  %v370 = vpop.f32.mrf.mxu0
  %v371 = vadd.f32 %v357, %v370
  %372 = vdwg.mxu0
  %v375 = vunpack.c.l.b16 %v195
  %v376 = vunpack.c.h.b16 %v195
  %v377 = vunpack.c.l.b16 %v197
  %v378 = vunpack.c.h.b16 %v197
  %v379 = vpack.c.b16 %v377, %v375
  %v380 = vpack.c.b16 %v378, %v376
  %v385 = vunpack.c.l.b16 %v199
  %v386 = vunpack.c.h.b16 %v199
  %v387 = vunpack.c.l.b16 %v201
  %v388 = vunpack.c.h.b16 %v201
  %v389 = vpack.c.b16 %v387, %v385
  %v390 = vpack.c.b16 %v388, %v386
  %393 = vmatpush.bf16.xpose.msra.mxu0 0
  %394 = vmatpush.bf16.xpose.msra.mxu0 0
  %395 = vmatpush.bf16.xpose.msra.mxu0 0
  %396 = vmatpush.bf16.xpose.msra.mxu0 0
  %397 = vmatpush.bf16.xpose.msra.mxu0 0
  %398 = vmatpush.bf16.xpose.msra.mxu0 0
  %399 = vmatpush.bf16.xpose.msra.mxu0 0
  %400 = vmatpush.bf16.xpose.msra.mxu0 %v389
  %401 = vmatmul.bf16.gmra.mxu0 %v379
  %v402 = vpop.f32.mrf.mxu0
  %v403 = vadd.f32 0.0, %v402
  %v404 = vpop.f32.mrf.mxu0
  %v405 = vadd.f32 0.0, %v404
  %406 = vdwg.mxu0
  %407 = vmatpush.bf16.xpose.msra.mxu0 0
  %408 = vmatpush.bf16.xpose.msra.mxu0 0
  %409 = vmatpush.bf16.xpose.msra.mxu0 0
  %410 = vmatpush.bf16.xpose.msra.mxu0 0
  %411 = vmatpush.bf16.xpose.msra.mxu0 0
  %412 = vmatpush.bf16.xpose.msra.mxu0 0
  %413 = vmatpush.bf16.xpose.msra.mxu0 0
  %414 = vmatpush.bf16.xpose.msra.mxu0 %v390
  %415 = vmatmul.bf16.gmra.mxu0 %v380
  %v416 = vpop.f32.mrf.mxu0
  %v417 = vadd.f32 %v403, %v416
  %v418 = vpop.f32.mrf.mxu0
  %v419 = vadd.f32 %v405, %v418
  %420 = vdwg.mxu0
  %v421 = vmul.f32 %v417, 0.5
  %v422 = vmul.f32 %v419, 0.5
  %v423 = vsel %vm89, %v421, -inf
  %v424 = vsel %vm89, %v422, -inf
  %v425 = vmax.f32 %v423, %v424
  %v426 = vrot.slane %v425, 4
  %v427 = vmax.f32 %v425, %v426
  %v428 = vrot.slane %v427, 2
  %v429 = vmax.f32 %v427, %v428
  %v430 = vrot.slane %v429, 1
  %v431 = vmax.f32 %v429, %v430
  %v432 = vsub.f32 %v421, %v431
  %v433 = vsub.f32 %v422, %v431
  %v434 = vmul.f32 %v432, 1.442695
  %v435 = vpow.pop %v434
  %v436 = vmul.f32 %v433, 1.442695
  %v437 = vpow.pop %v436
  %v438 = vsel %vm89, %v435, 0.0
  %v439 = vsel %vm89, %v437, 0.0
  %v440 = vadd.f32 %v438, %v439
  %v441 = vrot.slane %v440, 4
  %v442 = vadd.f32 %v440, %v441
  %v443 = vrot.slane %v442, 2
  %v444 = vadd.f32 %v442, %v443
  %v445 = vrot.slane %v444, 1
  %v446 = vadd.f32 %v444, %v445
  %v447 = vrcp.pop %v446
  %v448 = vmul.f32 %v435, %v447
  %v449 = vmul.f32 %v437, %v447
  %v450 = vpack.c.bf16 %v449, %v448
  %v451 = vpack.c.bf16 %v371, %v369
  %v454 = vunpack.c.l.b16 %v204
  %v455 = vunpack.c.h.b16 %v204
  %v456 = vunpack.c.l.b16 %v206
  %v457 = vunpack.c.h.b16 %v206
  %v458 = vpack.c.b16 %v456, %v454
  %v459 = vpack.c.b16 %v457, %v455
  %462 = vmatpush.bf16.msra.mxu0 %v320
  %463 = vmatpush.bf16.msra.mxu0 %v319
  %464 = vmatpush.bf16.msra.mxu0 %v318
  %465 = vmatpush.bf16.msra.mxu0 %v317
  %466 = vmatpush.bf16.msra.mxu0 %v316
  %467 = vmatpush.bf16.msra.mxu0 %v315
  %468 = vmatpush.bf16.msra.mxu0 %v314
  %469 = vmatpush.bf16.msra.mxu0 %v313
  %470 = vmatmul.bf16.gmra.mxu0 %v458
  %v471 = vpop.f32.mrf.mxu0
  %v472 = vadd.f32 0.0, %v471
  %v473 = vpop.f32.mrf.mxu0
  %v474 = vadd.f32 0.0, %v473
  %475 = vdwg.mxu0
  %476 = vmatpush.bf16.msra.mxu0 %v328
  %477 = vmatpush.bf16.msra.mxu0 %v327
  %478 = vmatpush.bf16.msra.mxu0 %v326
  %479 = vmatpush.bf16.msra.mxu0 %v325
  %480 = vmatpush.bf16.msra.mxu0 %v324
  %481 = vmatpush.bf16.msra.mxu0 %v323
  %482 = vmatpush.bf16.msra.mxu0 %v322
  %483 = vmatpush.bf16.msra.mxu0 %v321
  %484 = vmatmul.bf16.gmra.mxu0 %v459
  %v485 = vpop.f32.mrf.mxu0
  %v486 = vadd.f32 %v472, %v485
  %v487 = vpop.f32.mrf.mxu0
  %v488 = vadd.f32 %v474, %v487
  %489 = vdwg.mxu0
  %v492 = vunpack.c.l.b16 %v196
  %v493 = vunpack.c.h.b16 %v196
  %v494 = vunpack.c.l.b16 %v198
  %v495 = vunpack.c.h.b16 %v198
  %v496 = vpack.c.b16 %v494, %v492
  %v497 = vpack.c.b16 %v495, %v493
  %v502 = vunpack.c.l.b16 %v200
  %v503 = vunpack.c.h.b16 %v200
  %v504 = vunpack.c.l.b16 %v202
  %v505 = vunpack.c.h.b16 %v202
  %v506 = vpack.c.b16 %v504, %v502
  %v507 = vpack.c.b16 %v505, %v503
  %510 = vmatpush.bf16.xpose.msra.mxu0 0
  %511 = vmatpush.bf16.xpose.msra.mxu0 0
  %512 = vmatpush.bf16.xpose.msra.mxu0 0
  %513 = vmatpush.bf16.xpose.msra.mxu0 0
  %514 = vmatpush.bf16.xpose.msra.mxu0 0
  %515 = vmatpush.bf16.xpose.msra.mxu0 0
  %516 = vmatpush.bf16.xpose.msra.mxu0 0
  %517 = vmatpush.bf16.xpose.msra.mxu0 %v506
  %518 = vmatmul.bf16.gmra.mxu0 %v496
  %v519 = vpop.f32.mrf.mxu0
  %v520 = vadd.f32 0.0, %v519
  %v521 = vpop.f32.mrf.mxu0
  %v522 = vadd.f32 0.0, %v521
  %523 = vdwg.mxu0
  %524 = vmatpush.bf16.xpose.msra.mxu0 0
  %525 = vmatpush.bf16.xpose.msra.mxu0 0
  %526 = vmatpush.bf16.xpose.msra.mxu0 0
  %527 = vmatpush.bf16.xpose.msra.mxu0 0
  %528 = vmatpush.bf16.xpose.msra.mxu0 0
  %529 = vmatpush.bf16.xpose.msra.mxu0 0
  %530 = vmatpush.bf16.xpose.msra.mxu0 0
  %531 = vmatpush.bf16.xpose.msra.mxu0 %v507
  %532 = vmatmul.bf16.gmra.mxu0 %v497
  %v533 = vpop.f32.mrf.mxu0
  %v534 = vadd.f32 %v520, %v533
  %v535 = vpop.f32.mrf.mxu0
  %v536 = vadd.f32 %v522, %v535
  %537 = vdwg.mxu0
  %v538 = vmul.f32 %v534, 0.5
  %v539 = vmul.f32 %v536, 0.5
  %v540 = vsel %vm89, %v538, -inf
  %v541 = vsel %vm89, %v539, -inf
  %v542 = vmax.f32 %v540, %v541
  %v543 = vrot.slane %v542, 4
  %v544 = vmax.f32 %v542, %v543
  %v545 = vrot.slane %v544, 2
  %v546 = vmax.f32 %v544, %v545
  %v547 = vrot.slane %v546, 1
  %v548 = vmax.f32 %v546, %v547
  %v549 = vsub.f32 %v538, %v548
  %v550 = vsub.f32 %v539, %v548
  %v551 = vmul.f32 %v549, 1.442695
  %v552 = vpow.pop %v551
  %v553 = vmul.f32 %v550, 1.442695
  %v554 = vpow.pop %v553
  %v555 = vsel %vm89, %v552, 0.0
  %v556 = vsel %vm89, %v554, 0.0
  %v557 = vadd.f32 %v555, %v556
  %v558 = vrot.slane %v557, 4
  %v559 = vadd.f32 %v557, %v558
  %v560 = vrot.slane %v559, 2
  %v561 = vadd.f32 %v559, %v560
  %v562 = vrot.slane %v561, 1
  %v563 = vadd.f32 %v561, %v562
  %v564 = vrcp.pop %v563
  %v565 = vmul.f32 %v552, %v564
  %v566 = vmul.f32 %v554, %v564
  %v567 = vpack.c.bf16 %v566, %v565
  %v568 = vpack.c.bf16 %v488, %v486
  %v570 = vsel %vm89, %v567, 0
  %572 = vmatpush.bf16.msra.mxu0 0
  %573 = vmatpush.bf16.msra.mxu0 0
  %574 = vmatpush.bf16.msra.mxu0 0
  %575 = vmatpush.bf16.msra.mxu0 0
  %576 = vmatpush.bf16.msra.mxu0 0
  %577 = vmatpush.bf16.msra.mxu0 0
  %578 = vmatpush.bf16.msra.mxu0 0
  %579 = vmatpush.bf16.msra.mxu0 %v568
  %580 = vmatmul.bf16.gmra.mxu0 %v570
  %v581 = vpop.f32.mrf.mxu0
  %v582 = vadd.f32 0.0, %v581
  %v583 = vpop.f32.mrf.mxu0
  %v584 = vadd.f32 0.0, %v583
  %585 = vdwg.mxu0
  %v587 = vsel %vm89, %v450, 0
  %589 = vmatpush.bf16.msra.mxu0 0
  %590 = vmatpush.bf16.msra.mxu0 0
  %591 = vmatpush.bf16.msra.mxu0 0
  %592 = vmatpush.bf16.msra.mxu0 0
  %593 = vmatpush.bf16.msra.mxu0 0
  %594 = vmatpush.bf16.msra.mxu0 0
  %595 = vmatpush.bf16.msra.mxu0 0
  %596 = vmatpush.bf16.msra.mxu0 %v451
  %597 = vmatmul.bf16.gmra.mxu0 %v587
  %v598 = vpop.f32.mrf.mxu0
  %v599 = vadd.f32 %v582, %v598
  %v600 = vpop.f32.mrf.mxu0
  %v601 = vadd.f32 %v584, %v600
  %602 = vdwg.mxu0
  %v603 = vld [vmem:[%s3] sm:$0xff]
  %v604 = vld [vmem:[%s3 + $0x8] sm:$0xff]
  %v605 = vadd.f32 %v603, %v599
  %v606 = vadd.f32 %v604, %v601
  %vm607 = vcmask 72704
  %608 = vst.msk [vmem:[%s3] sm:$0xff] %vm607, %v605
  %609 = vst.msk [vmem:[%s3 + $0x8] sm:$0xff] %vm607, %v606
  // Predicated region
  $region18: #{self_conv2d_forward.2} parent=0 // pred_check
    _
  $region19: #{self_conv2d_forward.2} parent=0 // pred_check_branch
    %611 = sbr.rel (0) target = $region21
  $region20: #{self_conv2d_forward.2} parent=0 // pred_region
    _
  $region21: #{self_conv2d_forward.2} parent=0 // pred_fallthru
    _
  // Predicated region
  $region22: #{self_conv2d_forward.2} parent=0 // pred_check
    _
  $region23: #{self_conv2d_forward.2} parent=0 // pred_check_branch
    %613 = sbr.rel (0) target = $region25
  $region24: #{self_conv2d_forward.2} parent=0 // pred_region
    _
  $region25: #{self_conv2d_forward.2} parent=0 // pred_fallthru
    _

</llo_original>
